<compile_context>
chip_gen: v6e
topology: v6e:2x2x1
jax: 0.10.0
libtpu: 0.0.40
codegen_flags: <defaults>
</compile_context>

<pallas_src>
import jax
import jax.numpy as jnp
from jax.experimental import pallas as pl
from jax.experimental.pallas import tpu as pltpu

# Small, TPU-friendly shapes consistent with the module structure
# (module uses n_embd=768, n_head=12, block_size=1024; scaled down, n_embd % n_head == 0).
N_EMBD = 128
N_HEAD = 4
HEAD_SIZE = N_EMBD // N_HEAD
BATCH = 2
SEQ = 16
LN_EPS = 1e-5
NEG_BIG = -1e30  # finite "−inf" for the causal mask (exp underflows to exactly 0)


def _layer_norm(v, g, b):
    mu = jnp.mean(v, axis=-1, keepdims=True)
    var = jnp.mean((v - mu) ** 2, axis=-1, keepdims=True)
    return (v - mu) * jax.lax.rsqrt(var + LN_EPS) * g + b


def _block_kernel(x_ref,
                  ln1g_ref, ln1b_ref,
                  wqkv_ref, wproj_ref, bproj_ref,
                  ln2g_ref, ln2b_ref,
                  w1_ref, b1_ref, w2_ref, b2_ref,
                  out_ref):
    """Full Block forward on the whole (B, T, C) slab in one invocation.

    x_ref:   (B, T, C)  f32
    wqkv:    (C, 3C)    bf16   columns = [Q heads | K heads | V heads]
    wproj:   (C, C)     bf16   bproj: (1, C) f32
    w1:(C,4C) b1:(1,4C) w2:(4C,C) b2:(1,C)   (weights bf16, biases f32)
    ln*g/ln*b: (1, C)   f32
    """
    B, T, C = x_ref.shape
    H = N_HEAD
    hs = C // H
    bf16 = jnp.bfloat16

    # Flatten batch for all the heavy matmuls: (B*T, C) rows (leading-dim merge: free).
    x = x_ref[...].reshape(B * T, C)

    # ---- sa = MultiHeadAttention(ln1(x)) ----
    h1 = _layer_norm(x, ln1g_ref[...], ln1b_ref[...])                 # f32 (BT, C)

    # Fused QKV projection: one (BT, C) @ (C, 3C), bf16 operands, f32 accumulate.
    qkv = jnp.dot(h1.astype(bf16), wqkv_ref[...],
                  preferred_element_type=jnp.float32)                 # (BT, 3C)
    qkv3 = qkv.reshape(B, T, 3 * C)                                   # leading split: free

    # Causal mask built once at full (B, T, T) shape, reused by every head.
    row = jax.lax.broadcasted_iota(jnp.int32, (B, T, T), 1)
    col = jax.lax.broadcasted_iota(jnp.int32, (B, T, T), 2)
    causal = row >= col
    # NOTE: the reference module scales by C**-0.5 (n_embd), NOT head_size**-0.5.
    scale = float(C) ** -0.5

    head_outs = []
    for h in range(H):                   # static loop over heads (scores are per-head)
        q = qkv3[:, :, h * hs:(h + 1) * hs]                           # (B, T, hs)
        k = qkv3[:, :, C + h * hs:C + (h + 1) * hs]
        v = qkv3[:, :, 2 * C + h * hs:2 * C + (h + 1) * hs]

        wei = jnp.einsum('btd,bsd->bts', q.astype(bf16), k.astype(bf16),
                         preferred_element_type=jnp.float32) * scale  # (B, T, T)
        wei = jnp.where(causal, wei, NEG_BIG)                         # diag always live
        wei = wei - jnp.max(wei, axis=-1, keepdims=True)
        p = jnp.exp(wei)
        denom = jnp.sum(p, axis=-1, keepdims=True)                    # (B, T, 1)

        ho = jnp.einsum('bts,bsd->btd', p.astype(bf16), v.astype(bf16),
                        preferred_element_type=jnp.float32)           # (B, T, hs)
        # Rescale T*hs elements (not T*T); approx reciprocal goes to the EUP.
        head_outs.append(ho * pl.reciprocal(denom, approx=True))
    heads_cat = jnp.concatenate(head_outs, axis=-1).reshape(B * T, C)  # (BT, C)

    # Output projection: single (BT, C) @ (C, C).
    sa = jnp.dot(heads_cat.astype(bf16), wproj_ref[...],
                 preferred_element_type=jnp.float32) + bproj_ref[...]

    x1 = x + sa

    # ---- ff = FeedForward(ln2(x1)) ----
    h2 = _layer_norm(x1, ln2g_ref[...], ln2b_ref[...])
    ff = jnp.dot(h2.astype(bf16), w1_ref[...],
                 preferred_element_type=jnp.float32) + b1_ref[...]    # (BT, 4C)
    ff = jnp.maximum(ff, 0.0)                                         # ReLU
    ff = jnp.dot(ff.astype(bf16), w2_ref[...],
                 preferred_element_type=jnp.float32) + b2_ref[...]    # (BT, C)

    out_ref[...] = (x1 + ff).reshape(B, T, C).astype(out_ref.dtype)


def block_forward(x, prm):
    B, T, C = x.shape
    args = (x,
            prm["ln1_g"], prm["ln1_b"],
            prm["wqkv"], prm["wproj"], prm["bproj"],
            prm["ln2_g"], prm["ln2_b"],
            prm["w1"], prm["b1"], prm["w2"], prm["b2"])
    vmem = lambda: pl.BlockSpec(memory_space=pltpu.MemorySpace.VMEM)
    return pl.pallas_call(
        _block_kernel,
        out_shape=jax.ShapeDtypeStruct((B, T, C), x.dtype),
        in_specs=[vmem() for _ in args],
        out_specs=pl.BlockSpec(memory_space=pltpu.MemorySpace.VMEM),
    )(*args)


def init_params(key, n_embd, n_head):
    hs = n_embd // n_head
    ks = jax.random.split(key, 9)

    def lin(k, fan_in, shape):
        bound = 1.0 / (fan_in ** 0.5)
        return jax.random.uniform(k, shape, jnp.float32, -bound, bound)

    wq = lin(ks[0], n_embd, (n_embd, n_embd))   # per-head Q Linears, concatenated
    wk = lin(ks[1], n_embd, (n_embd, n_embd))
    wv = lin(ks[2], n_embd, (n_embd, n_embd))
    return dict(
        ln1_g=jnp.ones((1, n_embd), jnp.float32),
        ln1_b=jnp.zeros((1, n_embd), jnp.float32),
        # Fused QKV weight: columns = [Q | K | V], bf16 for the MXU path.
        wqkv=jnp.concatenate([wq, wk, wv], axis=1).astype(jnp.bfloat16),
        wproj=lin(ks[3], n_head * hs, (n_embd, n_embd)).astype(jnp.bfloat16),
        bproj=lin(ks[4], n_head * hs, (1, n_embd)),
        ln2_g=jnp.ones((1, n_embd), jnp.float32),
        ln2_b=jnp.zeros((1, n_embd), jnp.float32),
        w1=lin(ks[5], n_embd, (n_embd, 4 * n_embd)).astype(jnp.bfloat16),
        b1=lin(ks[6], n_embd, (1, 4 * n_embd)),
        w2=lin(ks[7], 4 * n_embd, (4 * n_embd, n_embd)).astype(jnp.bfloat16),
        b2=lin(ks[8], 4 * n_embd, (1, n_embd)),
    )


def ref_block(x, prm):
    """Pure-JAX reference matching the PyTorch Block semantics.

    Mirrors the kernel's bf16 matmul operands (f32 accumulation) so the only
    deviations are MXU reduction order and the approx softmax reciprocal.
    """
    bf16 = jnp.bfloat16
    B, T, C = x.shape
    H, hs = N_HEAD, HEAD_SIZE

    def ln(v, g, b):
        mu = v.mean(-1, keepdims=True)
        var = ((v - mu) ** 2).mean(-1, keepdims=True)
        return (v - mu) / jnp.sqrt(var + LN_EPS) * g + b

    h1 = ln(x, prm["ln1_g"][0], prm["ln1_b"][0])
    qkv = jnp.dot(h1.astype(bf16), prm["wqkv"],
                  preferred_element_type=jnp.float32)                 # (B, T, 3C)
    causal = jnp.tril(jnp.ones((T, T), bool))
    outs = []
    for h in range(H):
        q = qkv[..., h * hs:(h + 1) * hs]
        k = qkv[..., C + h * hs:C + (h + 1) * hs]
        v = qkv[..., 2 * C + h * hs:2 * C + (h + 1) * hs]
        wei = jnp.einsum("btd,bsd->bts", q.astype(bf16), k.astype(bf16),
                         preferred_element_type=jnp.float32) * (C ** -0.5)
        wei = jnp.where(causal, wei, -jnp.inf)
        wei = jax.nn.softmax(wei, axis=-1)
        outs.append(jnp.einsum("bts,bsd->btd", wei.astype(bf16), v.astype(bf16),
                               preferred_element_type=jnp.float32))
    heads = jnp.concatenate(outs, axis=-1)                            # (B, T, C)
    sa = jnp.dot(heads.astype(bf16), prm["wproj"],
                 preferred_element_type=jnp.float32) + prm["bproj"][0]
    x1 = x + sa
    h2 = ln(x1, prm["ln2_g"][0], prm["ln2_b"][0])
    ff = jnp.dot(h2.astype(bf16), prm["w1"],
                 preferred_element_type=jnp.float32) + prm["b1"][0]
    ff = jax.nn.relu(ff)
    ff = jnp.dot(ff.astype(bf16), prm["w2"],
                 preferred_element_type=jnp.float32) + prm["b2"][0]
    return x1 + ff


if __name__ == "__main__":
    key = jax.random.PRNGKey(0)
    k_x, k_p = jax.random.split(key)
    x = jax.random.normal(k_x, (BATCH, SEQ, N_EMBD), jnp.float32)
    params = init_params(k_p, N_EMBD, N_HEAD)

    out = block_forward(x, params)
    out = jax.block_until_ready(out)

    expected = ref_block(x, params)
    assert out.shape == (BATCH, SEQ, N_EMBD)
    # Tolerance accounts for bf16 rounding points that differ slightly from the
    # reference (normalized vs. post-matmul softmax rescale) and approx reciprocal.
    assert jnp.allclose(out, expected, rtol=2e-2, atol=2e-2), (
        float(jnp.max(jnp.abs(out - expected))))

    print("KERNEL_OK")
</pallas_src>

<mosaic_0001>
module attributes {stable_mosaic.version = 11 : i64} {
  func.func @_block_kernel(%arg0: memref<2x16x128xf32, #tpu.memory_space<vmem>>, %arg1: memref<1x128xf32, #tpu.memory_space<vmem>>, %arg2: memref<1x128xf32, #tpu.memory_space<vmem>>, %arg3: memref<128x384xbf16, #tpu.memory_space<vmem>>, %arg4: memref<128x128xbf16, #tpu.memory_space<vmem>>, %arg5: memref<1x128xf32, #tpu.memory_space<vmem>>, %arg6: memref<1x128xf32, #tpu.memory_space<vmem>>, %arg7: memref<1x128xf32, #tpu.memory_space<vmem>>, %arg8: memref<128x512xbf16, #tpu.memory_space<vmem>>, %arg9: memref<1x512xf32, #tpu.memory_space<vmem>>, %arg10: memref<512x128xbf16, #tpu.memory_space<vmem>>, %arg11: memref<1x128xf32, #tpu.memory_space<vmem>>, %arg12: memref<2x16x128xf32, #tpu.memory_space<vmem>>) attributes {dimension_semantics = [], scalar_prefetch = 0 : i64, scratch_operands = 0 : i64, tpu.core_type = #tpu.core_type<tc>} {
    %c0 = arith.constant 0 : index
    %c0_0 = arith.constant 0 : index
    %c0_1 = arith.constant 0 : index
    %0 = vector.load %arg0[%c0, %c0_0, %c0_1] : memref<2x16x128xf32, #tpu.memory_space<vmem>>, vector<2x16x128xf32>
    %1 = vector.shape_cast %0 : vector<2x16x128xf32> to vector<32x128xf32>
    %c0_2 = arith.constant 0 : index
    %c0_3 = arith.constant 0 : index
    %2 = vector.load %arg1[%c0_2, %c0_3] : memref<1x128xf32, #tpu.memory_space<vmem>>, vector<1x128xf32>
    %c0_4 = arith.constant 0 : index
    %c0_5 = arith.constant 0 : index
    %3 = vector.load %arg2[%c0_4, %c0_5] : memref<1x128xf32, #tpu.memory_space<vmem>>, vector<1x128xf32>
    %cst = arith.constant dense<0.000000e+00> : vector<32xf32>
    %4 = vector.multi_reduction <add>, %1, %cst [1] : vector<32x128xf32> to vector<32xf32>
    %5 = vector.shape_cast %4 : vector<32xf32> to vector<32x1xf32>
    %cst_6 = arith.constant 1.280000e+02 : f32
    %6 = vector.broadcast %cst_6 : f32 to vector<32x1xf32>
    %7 = arith.divf %5, %6 : vector<32x1xf32>
    %8 = vector.broadcast %7 : vector<32x1xf32> to vector<32x128xf32>
    %9 = arith.subf %1, %8 : vector<32x128xf32>
    %10 = arith.mulf %9, %9 : vector<32x128xf32>
    %cst_7 = arith.constant dense<0.000000e+00> : vector<32xf32>
    %11 = vector.multi_reduction <add>, %10, %cst_7 [1] : vector<32x128xf32> to vector<32xf32>
    %12 = vector.shape_cast %11 : vector<32xf32> to vector<32x1xf32>
    %cst_8 = arith.constant 1.280000e+02 : f32
    %13 = vector.broadcast %cst_8 : f32 to vector<32x1xf32>
    %14 = arith.divf %12, %13 : vector<32x1xf32>
    %15 = vector.broadcast %7 : vector<32x1xf32> to vector<32x128xf32>
    %16 = arith.subf %1, %15 : vector<32x128xf32>
    %cst_9 = arith.constant 9.99999974E-6 : f32
    %17 = vector.broadcast %cst_9 : f32 to vector<32x1xf32>
    %18 = arith.addf %14, %17 : vector<32x1xf32>
    %19 = math.rsqrt %18 : vector<32x1xf32>
    %20 = vector.broadcast %19 : vector<32x1xf32> to vector<32x128xf32>
    %21 = arith.mulf %16, %20 : vector<32x128xf32>
    %22 = vector.broadcast %2 : vector<1x128xf32> to vector<32x128xf32>
    %23 = arith.mulf %21, %22 : vector<32x128xf32>
    %24 = vector.broadcast %3 : vector<1x128xf32> to vector<32x128xf32>
    %25 = arith.addf %23, %24 : vector<32x128xf32>
    %26 = arith.truncf %25 : vector<32x128xf32> to vector<32x128xbf16>
    %c0_10 = arith.constant 0 : index
    %c0_11 = arith.constant 0 : index
    %27 = vector.load %arg3[%c0_10, %c0_11] : memref<128x384xbf16, #tpu.memory_space<vmem>>, vector<128x384xbf16>
    %cst_12 = arith.constant dense<0.000000e+00> : vector<32x384xf32>
    %28 = tpu.matmul %26, %27, %cst_12 {dimension_numbers = #tpu.dot_dimension_numbers<[1], [0], [0], [1], [0, 0, 1, 1], [], []>} : vector<32x128xbf16>, vector<128x384xbf16>, vector<32x384xf32> -> vector<32x384xf32>
    %29 = vector.shape_cast %28 : vector<32x384xf32> to vector<2x16x384xf32>
    %30 = tpu.iota {dimensions = array<i32: 1>} : vector<2x16x16xi32>
    %31 = tpu.iota {dimensions = array<i32: 2>} : vector<2x16x16xi32>
    %32 = arith.cmpi sge, %30, %31 : vector<2x16x16xi32>
    %33 = vector.extract_strided_slice %29 {offsets = [0, 0, 0], sizes = [2, 16, 32], strides = [1, 1, 1]} : vector<2x16x384xf32> to vector<2x16x32xf32>
    %34 = vector.extract_strided_slice %29 {offsets = [0, 0, 128], sizes = [2, 16, 32], strides = [1, 1, 1]} : vector<2x16x384xf32> to vector<2x16x32xf32>
    %35 = vector.extract_strided_slice %29 {offsets = [0, 0, 256], sizes = [2, 16, 32], strides = [1, 1, 1]} : vector<2x16x384xf32> to vector<2x16x32xf32>
    %36 = arith.truncf %33 : vector<2x16x32xf32> to vector<2x16x32xbf16>
    %37 = arith.truncf %34 : vector<2x16x32xf32> to vector<2x16x32xbf16>
    "tpu.trace_start"() <{level = 10 : i32, message = "btd,bsd->bts"}> : () -> ()
    %cst_13 = arith.constant dense<0.000000e+00> : vector<2x16x16xf32>
    %38 = tpu.matmul %36, %37, %cst_13 {dimension_numbers = #tpu.dot_dimension_numbers<[2], [2], [1], [1], [0, 0, 0, 1, 1, 1], [0], [0]>} : vector<2x16x32xbf16>, vector<2x16x32xbf16>, vector<2x16x16xf32> -> vector<2x16x16xf32>
    "tpu.trace_stop"() : () -> ()
    %cst_14 = arith.constant 0.0883883461 : f32
    %39 = vector.broadcast %cst_14 : f32 to vector<2x16x16xf32>
    %40 = arith.mulf %38, %39 : vector<2x16x16xf32>
    %cst_15 = arith.constant -1.000000e+30 : f32
    %41 = vector.broadcast %cst_15 : f32 to vector<2x16x16xf32>
    %42 = arith.select %32, %40, %41 : vector<2x16x16xi1>, vector<2x16x16xf32>
    %cst_16 = arith.constant dense<0xFF800000> : vector<2x16xf32>
    %43 = vector.multi_reduction <maximumf>, %42, %cst_16 [2] : vector<2x16x16xf32> to vector<2x16xf32>
    %44 = vector.shape_cast %43 : vector<2x16xf32> to vector<2x16x1xf32>
    %45 = vector.broadcast %44 : vector<2x16x1xf32> to vector<2x16x16xf32>
    %46 = arith.subf %42, %45 : vector<2x16x16xf32>
    %47 = math.exp %46 : vector<2x16x16xf32>
    %cst_17 = arith.constant dense<0.000000e+00> : vector<2x16xf32>
    %48 = vector.multi_reduction <add>, %47, %cst_17 [2] : vector<2x16x16xf32> to vector<2x16xf32>
    %49 = vector.shape_cast %48 : vector<2x16xf32> to vector<2x16x1xf32>
    %50 = arith.truncf %47 : vector<2x16x16xf32> to vector<2x16x16xbf16>
    %51 = arith.truncf %35 : vector<2x16x32xf32> to vector<2x16x32xbf16>
    "tpu.trace_start"() <{level = 10 : i32, message = "bts,bsd->btd"}> : () -> ()
    %cst_18 = arith.constant dense<0.000000e+00> : vector<2x16x32xf32>
    %52 = tpu.matmul %50, %51, %cst_18 {dimension_numbers = #tpu.dot_dimension_numbers<[2], [1], [1], [2], [0, 0, 0, 1, 1, 2], [0], [0]>} : vector<2x16x16xbf16>, vector<2x16x32xbf16>, vector<2x16x32xf32> -> vector<2x16x32xf32>
    "tpu.trace_stop"() : () -> ()
    %53 = tpu.reciprocal %49 {approx = true} : vector<2x16x1xf32> -> vector<2x16x1xf32>
    %54 = vector.broadcast %53 : vector<2x16x1xf32> to vector<2x16x32xf32>
    %55 = arith.mulf %52, %54 : vector<2x16x32xf32>
    %56 = vector.extract_strided_slice %29 {offsets = [0, 0, 32], sizes = [2, 16, 32], strides = [1, 1, 1]} : vector<2x16x384xf32> to vector<2x16x32xf32>
    %57 = vector.extract_strided_slice %29 {offsets = [0, 0, 160], sizes = [2, 16, 32], strides = [1, 1, 1]} : vector<2x16x384xf32> to vector<2x16x32xf32>
    %58 = vector.extract_strided_slice %29 {offsets = [0, 0, 288], sizes = [2, 16, 32], strides = [1, 1, 1]} : vector<2x16x384xf32> to vector<2x16x32xf32>
    %59 = arith.truncf %56 : vector<2x16x32xf32> to vector<2x16x32xbf16>
    %60 = arith.truncf %57 : vector<2x16x32xf32> to vector<2x16x32xbf16>
    "tpu.trace_start"() <{level = 10 : i32, message = "btd,bsd->bts"}> : () -> ()
    %cst_19 = arith.constant dense<0.000000e+00> : vector<2x16x16xf32>
    %61 = tpu.matmul %59, %60, %cst_19 {dimension_numbers = #tpu.dot_dimension_numbers<[2], [2], [1], [1], [0, 0, 0, 1, 1, 1], [0], [0]>} : vector<2x16x32xbf16>, vector<2x16x32xbf16>, vector<2x16x16xf32> -> vector<2x16x16xf32>
    "tpu.trace_stop"() : () -> ()
    %cst_20 = arith.constant 0.0883883461 : f32
    %62 = vector.broadcast %cst_20 : f32 to vector<2x16x16xf32>
    %63 = arith.mulf %61, %62 : vector<2x16x16xf32>
    %cst_21 = arith.constant -1.000000e+30 : f32
    %64 = vector.broadcast %cst_21 : f32 to vector<2x16x16xf32>
    %65 = arith.select %32, %63, %64 : vector<2x16x16xi1>, vector<2x16x16xf32>
    %cst_22 = arith.constant dense<0xFF800000> : vector<2x16xf32>
    %66 = vector.multi_reduction <maximumf>, %65, %cst_22 [2] : vector<2x16x16xf32> to vector<2x16xf32>
    %67 = vector.shape_cast %66 : vector<2x16xf32> to vector<2x16x1xf32>
    %68 = vector.broadcast %67 : vector<2x16x1xf32> to vector<2x16x16xf32>
    %69 = arith.subf %65, %68 : vector<2x16x16xf32>
    %70 = math.exp %69 : vector<2x16x16xf32>
    %cst_23 = arith.constant dense<0.000000e+00> : vector<2x16xf32>
    %71 = vector.multi_reduction <add>, %70, %cst_23 [2] : vector<2x16x16xf32> to vector<2x16xf32>
    %72 = vector.shape_cast %71 : vector<2x16xf32> to vector<2x16x1xf32>
    %73 = arith.truncf %70 : vector<2x16x16xf32> to vector<2x16x16xbf16>
    %74 = arith.truncf %58 : vector<2x16x32xf32> to vector<2x16x32xbf16>
    "tpu.trace_start"() <{level = 10 : i32, message = "bts,bsd->btd"}> : () -> ()
    %cst_24 = arith.constant dense<0.000000e+00> : vector<2x16x32xf32>
    %75 = tpu.matmul %73, %74, %cst_24 {dimension_numbers = #tpu.dot_dimension_numbers<[2], [1], [1], [2], [0, 0, 0, 1, 1, 2], [0], [0]>} : vector<2x16x16xbf16>, vector<2x16x32xbf16>, vector<2x16x32xf32> -> vector<2x16x32xf32>
    "tpu.trace_stop"() : () -> ()
    %76 = tpu.reciprocal %72 {approx = true} : vector<2x16x1xf32> -> vector<2x16x1xf32>
    %77 = vector.broadcast %76 : vector<2x16x1xf32> to vector<2x16x32xf32>
    %78 = arith.mulf %75, %77 : vector<2x16x32xf32>
    %79 = vector.extract_strided_slice %29 {offsets = [0, 0, 64], sizes = [2, 16, 32], strides = [1, 1, 1]} : vector<2x16x384xf32> to vector<2x16x32xf32>
    %80 = vector.extract_strided_slice %29 {offsets = [0, 0, 192], sizes = [2, 16, 32], strides = [1, 1, 1]} : vector<2x16x384xf32> to vector<2x16x32xf32>
    %81 = vector.extract_strided_slice %29 {offsets = [0, 0, 320], sizes = [2, 16, 32], strides = [1, 1, 1]} : vector<2x16x384xf32> to vector<2x16x32xf32>
    %82 = arith.truncf %79 : vector<2x16x32xf32> to vector<2x16x32xbf16>
    %83 = arith.truncf %80 : vector<2x16x32xf32> to vector<2x16x32xbf16>
    "tpu.trace_start"() <{level = 10 : i32, message = "btd,bsd->bts"}> : () -> ()
    %cst_25 = arith.constant dense<0.000000e+00> : vector<2x16x16xf32>
    %84 = tpu.matmul %82, %83, %cst_25 {dimension_numbers = #tpu.dot_dimension_numbers<[2], [2], [1], [1], [0, 0, 0, 1, 1, 1], [0], [0]>} : vector<2x16x32xbf16>, vector<2x16x32xbf16>, vector<2x16x16xf32> -> vector<2x16x16xf32>
    "tpu.trace_stop"() : () -> ()
    %cst_26 = arith.constant 0.0883883461 : f32
    %85 = vector.broadcast %cst_26 : f32 to vector<2x16x16xf32>
    %86 = arith.mulf %84, %85 : vector<2x16x16xf32>
    %cst_27 = arith.constant -1.000000e+30 : f32
    %87 = vector.broadcast %cst_27 : f32 to vector<2x16x16xf32>
    %88 = arith.select %32, %86, %87 : vector<2x16x16xi1>, vector<2x16x16xf32>
    %cst_28 = arith.constant dense<0xFF800000> : vector<2x16xf32>
    %89 = vector.multi_reduction <maximumf>, %88, %cst_28 [2] : vector<2x16x16xf32> to vector<2x16xf32>
    %90 = vector.shape_cast %89 : vector<2x16xf32> to vector<2x16x1xf32>
    %91 = vector.broadcast %90 : vector<2x16x1xf32> to vector<2x16x16xf32>
    %92 = arith.subf %88, %91 : vector<2x16x16xf32>
    %93 = math.exp %92 : vector<2x16x16xf32>
    %cst_29 = arith.constant dense<0.000000e+00> : vector<2x16xf32>
    %94 = vector.multi_reduction <add>, %93, %cst_29 [2] : vector<2x16x16xf32> to vector<2x16xf32>
    %95 = vector.shape_cast %94 : vector<2x16xf32> to vector<2x16x1xf32>
    %96 = arith.truncf %93 : vector<2x16x16xf32> to vector<2x16x16xbf16>
    %97 = arith.truncf %81 : vector<2x16x32xf32> to vector<2x16x32xbf16>
    "tpu.trace_start"() <{level = 10 : i32, message = "bts,bsd->btd"}> : () -> ()
    %cst_30 = arith.constant dense<0.000000e+00> : vector<2x16x32xf32>
    %98 = tpu.matmul %96, %97, %cst_30 {dimension_numbers = #tpu.dot_dimension_numbers<[2], [1], [1], [2], [0, 0, 0, 1, 1, 2], [0], [0]>} : vector<2x16x16xbf16>, vector<2x16x32xbf16>, vector<2x16x32xf32> -> vector<2x16x32xf32>
    "tpu.trace_stop"() : () -> ()
    %99 = tpu.reciprocal %95 {approx = true} : vector<2x16x1xf32> -> vector<2x16x1xf32>
    %100 = vector.broadcast %99 : vector<2x16x1xf32> to vector<2x16x32xf32>
    %101 = arith.mulf %98, %100 : vector<2x16x32xf32>
    %102 = vector.extract_strided_slice %29 {offsets = [0, 0, 96], sizes = [2, 16, 32], strides = [1, 1, 1]} : vector<2x16x384xf32> to vector<2x16x32xf32>
    %103 = vector.extract_strided_slice %29 {offsets = [0, 0, 224], sizes = [2, 16, 32], strides = [1, 1, 1]} : vector<2x16x384xf32> to vector<2x16x32xf32>
    %104 = vector.extract_strided_slice %29 {offsets = [0, 0, 352], sizes = [2, 16, 32], strides = [1, 1, 1]} : vector<2x16x384xf32> to vector<2x16x32xf32>
    %105 = arith.truncf %102 : vector<2x16x32xf32> to vector<2x16x32xbf16>
    %106 = arith.truncf %103 : vector<2x16x32xf32> to vector<2x16x32xbf16>
    "tpu.trace_start"() <{level = 10 : i32, message = "btd,bsd->bts"}> : () -> ()
    %cst_31 = arith.constant dense<0.000000e+00> : vector<2x16x16xf32>
    %107 = tpu.matmul %105, %106, %cst_31 {dimension_numbers = #tpu.dot_dimension_numbers<[2], [2], [1], [1], [0, 0, 0, 1, 1, 1], [0], [0]>} : vector<2x16x32xbf16>, vector<2x16x32xbf16>, vector<2x16x16xf32> -> vector<2x16x16xf32>
    "tpu.trace_stop"() : () -> ()
    %cst_32 = arith.constant 0.0883883461 : f32
    %108 = vector.broadcast %cst_32 : f32 to vector<2x16x16xf32>
    %109 = arith.mulf %107, %108 : vector<2x16x16xf32>
    %cst_33 = arith.constant -1.000000e+30 : f32
    %110 = vector.broadcast %cst_33 : f32 to vector<2x16x16xf32>
    %111 = arith.select %32, %109, %110 : vector<2x16x16xi1>, vector<2x16x16xf32>
    %cst_34 = arith.constant dense<0xFF800000> : vector<2x16xf32>
    %112 = vector.multi_reduction <maximumf>, %111, %cst_34 [2] : vector<2x16x16xf32> to vector<2x16xf32>
    %113 = vector.shape_cast %112 : vector<2x16xf32> to vector<2x16x1xf32>
    %114 = vector.broadcast %113 : vector<2x16x1xf32> to vector<2x16x16xf32>
    %115 = arith.subf %111, %114 : vector<2x16x16xf32>
    %116 = math.exp %115 : vector<2x16x16xf32>
    %cst_35 = arith.constant dense<0.000000e+00> : vector<2x16xf32>
    %117 = vector.multi_reduction <add>, %116, %cst_35 [2] : vector<2x16x16xf32> to vector<2x16xf32>
    %118 = vector.shape_cast %117 : vector<2x16xf32> to vector<2x16x1xf32>
    %119 = arith.truncf %116 : vector<2x16x16xf32> to vector<2x16x16xbf16>
    %120 = arith.truncf %104 : vector<2x16x32xf32> to vector<2x16x32xbf16>
    "tpu.trace_start"() <{level = 10 : i32, message = "bts,bsd->btd"}> : () -> ()
    %cst_36 = arith.constant dense<0.000000e+00> : vector<2x16x32xf32>
    %121 = tpu.matmul %119, %120, %cst_36 {dimension_numbers = #tpu.dot_dimension_numbers<[2], [1], [1], [2], [0, 0, 0, 1, 1, 2], [0], [0]>} : vector<2x16x16xbf16>, vector<2x16x32xbf16>, vector<2x16x32xf32> -> vector<2x16x32xf32>
    "tpu.trace_stop"() : () -> ()
    %122 = tpu.reciprocal %118 {approx = true} : vector<2x16x1xf32> -> vector<2x16x1xf32>
    %123 = vector.broadcast %122 : vector<2x16x1xf32> to vector<2x16x32xf32>
    %124 = arith.mulf %121, %123 : vector<2x16x32xf32>
    %125 = tpu.concatenate %55, %78, %101, %124 in 2 : vector<2x16x32xf32>, vector<2x16x32xf32>, vector<2x16x32xf32>, vector<2x16x32xf32> -> vector<2x16x128xf32>
    %126 = vector.shape_cast %125 : vector<2x16x128xf32> to vector<32x128xf32>
    %127 = arith.truncf %126 : vector<32x128xf32> to vector<32x128xbf16>
    %c0_37 = arith.constant 0 : index
    %c0_38 = arith.constant 0 : index
    %128 = vector.load %arg4[%c0_37, %c0_38] : memref<128x128xbf16, #tpu.memory_space<vmem>>, vector<128x128xbf16>
    %cst_39 = arith.constant dense<0.000000e+00> : vector<32x128xf32>
    %129 = tpu.matmul %127, %128, %cst_39 {dimension_numbers = #tpu.dot_dimension_numbers<[1], [0], [0], [1], [0, 0, 1, 1], [], []>} : vector<32x128xbf16>, vector<128x128xbf16>, vector<32x128xf32> -> vector<32x128xf32>
    %c0_40 = arith.constant 0 : index
    %c0_41 = arith.constant 0 : index
    %130 = vector.load %arg5[%c0_40, %c0_41] : memref<1x128xf32, #tpu.memory_space<vmem>>, vector<1x128xf32>
    %131 = vector.broadcast %130 : vector<1x128xf32> to vector<32x128xf32>
    %132 = arith.addf %129, %131 : vector<32x128xf32>
    %133 = arith.addf %1, %132 : vector<32x128xf32>
    %c0_42 = arith.constant 0 : index
    %c0_43 = arith.constant 0 : index
    %134 = vector.load %arg6[%c0_42, %c0_43] : memref<1x128xf32, #tpu.memory_space<vmem>>, vector<1x128xf32>
    %c0_44 = arith.constant 0 : index
    %c0_45 = arith.constant 0 : index
    %135 = vector.load %arg7[%c0_44, %c0_45] : memref<1x128xf32, #tpu.memory_space<vmem>>, vector<1x128xf32>
    %cst_46 = arith.constant dense<0.000000e+00> : vector<32xf32>
    %136 = vector.multi_reduction <add>, %133, %cst_46 [1] : vector<32x128xf32> to vector<32xf32>
    %137 = vector.shape_cast %136 : vector<32xf32> to vector<32x1xf32>
    %cst_47 = arith.constant 1.280000e+02 : f32
    %138 = vector.broadcast %cst_47 : f32 to vector<32x1xf32>
    %139 = arith.divf %137, %138 : vector<32x1xf32>
    %140 = vector.broadcast %139 : vector<32x1xf32> to vector<32x128xf32>
    %141 = arith.subf %133, %140 : vector<32x128xf32>
    %142 = arith.mulf %141, %141 : vector<32x128xf32>
    %cst_48 = arith.constant dense<0.000000e+00> : vector<32xf32>
    %143 = vector.multi_reduction <add>, %142, %cst_48 [1] : vector<32x128xf32> to vector<32xf32>
    %144 = vector.shape_cast %143 : vector<32xf32> to vector<32x1xf32>
    %cst_49 = arith.constant 1.280000e+02 : f32
    %145 = vector.broadcast %cst_49 : f32 to vector<32x1xf32>
    %146 = arith.divf %144, %145 : vector<32x1xf32>
    %147 = vector.broadcast %139 : vector<32x1xf32> to vector<32x128xf32>
    %148 = arith.subf %133, %147 : vector<32x128xf32>
    %cst_50 = arith.constant 9.99999974E-6 : f32
    %149 = vector.broadcast %cst_50 : f32 to vector<32x1xf32>
    %150 = arith.addf %146, %149 : vector<32x1xf32>
    %151 = math.rsqrt %150 : vector<32x1xf32>
    %152 = vector.broadcast %151 : vector<32x1xf32> to vector<32x128xf32>
    %153 = arith.mulf %148, %152 : vector<32x128xf32>
    %154 = vector.broadcast %134 : vector<1x128xf32> to vector<32x128xf32>
    %155 = arith.mulf %153, %154 : vector<32x128xf32>
    %156 = vector.broadcast %135 : vector<1x128xf32> to vector<32x128xf32>
    %157 = arith.addf %155, %156 : vector<32x128xf32>
    %158 = arith.truncf %157 : vector<32x128xf32> to vector<32x128xbf16>
    %c0_51 = arith.constant 0 : index
    %c0_52 = arith.constant 0 : index
    %159 = vector.load %arg8[%c0_51, %c0_52] : memref<128x512xbf16, #tpu.memory_space<vmem>>, vector<128x512xbf16>
    %cst_53 = arith.constant dense<0.000000e+00> : vector<32x512xf32>
    %160 = tpu.matmul %158, %159, %cst_53 {dimension_numbers = #tpu.dot_dimension_numbers<[1], [0], [0], [1], [0, 0, 1, 1], [], []>} : vector<32x128xbf16>, vector<128x512xbf16>, vector<32x512xf32> -> vector<32x512xf32>
    %c0_54 = arith.constant 0 : index
    %c0_55 = arith.constant 0 : index
    %161 = vector.load %arg9[%c0_54, %c0_55] : memref<1x512xf32, #tpu.memory_space<vmem>>, vector<1x512xf32>
    %162 = vector.broadcast %161 : vector<1x512xf32> to vector<32x512xf32>
    %163 = arith.addf %160, %162 : vector<32x512xf32>
    %cst_56 = arith.constant 0.000000e+00 : f32
    %164 = vector.broadcast %cst_56 : f32 to vector<32x512xf32>
    %165 = arith.maximumf %163, %164 : vector<32x512xf32>
    %166 = arith.truncf %165 : vector<32x512xf32> to vector<32x512xbf16>
    %c0_57 = arith.constant 0 : index
    %c0_58 = arith.constant 0 : index
    %167 = vector.load %arg10[%c0_57, %c0_58] : memref<512x128xbf16, #tpu.memory_space<vmem>>, vector<512x128xbf16>
    %cst_59 = arith.constant dense<0.000000e+00> : vector<32x128xf32>
    %168 = tpu.matmul %166, %167, %cst_59 {dimension_numbers = #tpu.dot_dimension_numbers<[1], [0], [0], [1], [0, 0, 1, 1], [], []>} : vector<32x512xbf16>, vector<512x128xbf16>, vector<32x128xf32> -> vector<32x128xf32>
    %c0_60 = arith.constant 0 : index
    %c0_61 = arith.constant 0 : index
    %169 = vector.load %arg11[%c0_60, %c0_61] : memref<1x128xf32, #tpu.memory_space<vmem>>, vector<1x128xf32>
    %170 = vector.broadcast %169 : vector<1x128xf32> to vector<32x128xf32>
    %171 = arith.addf %168, %170 : vector<32x128xf32>
    %172 = arith.addf %133, %171 : vector<32x128xf32>
    %173 = vector.shape_cast %172 : vector<32x128xf32> to vector<2x16x128xf32>
    %c0_62 = arith.constant 0 : index
    %c0_63 = arith.constant 0 : index
    %c0_64 = arith.constant 0 : index
    %174 = vector.load %arg12[%c0_62, %c0_63, %c0_64] : memref<2x16x128xf32, #tpu.memory_space<vmem>>, vector<2x16x128xf32>
    tpu.vector_store %arg12[%c0_62, %c0_63, %c0_64], %173 {strides = array<i32>} : memref<2x16x128xf32, #tpu.memory_space<vmem>>, vector<2x16x128xf32>,
    return
  }
}

</mosaic_0001>

<llo_original>
// kernel: tpu_custom_call.1
$region0: #{tpu_custom_call.1}
  #allocation0 [shape = 'u32[]', space=smem, size = 0x4, offset = 0x4, fixed_abs, tag = 'smem constant byte address 0x4 - core index']
  #allocation1 [shape = 'u32[144,128]{1,0:T(1,128)}', space=vmem, size = 0x12000, scoped, tag = 'internal scratch']
  %s0 = inlined_call_operand.hbm [shape: f32[2,16,128], index: 0, kind: input, shape index: {}]
  %s1 = inlined_call_operand.vmem [shape: f32[1,128], index: 1, kind: input, shape index: {}]
  %s2 = inlined_call_operand.vmem [shape: f32[1,128], index: 2, kind: input, shape index: {}]
  %s3 = inlined_call_operand.hbm [shape: bf16[128,384], index: 3, kind: input, shape index: {}]
  %s4 = inlined_call_operand.hbm [shape: bf16[128,128], index: 4, kind: input, shape index: {}]
  %s5 = inlined_call_operand.vmem [shape: f32[1,128], index: 5, kind: input, shape index: {}]
  %s6 = inlined_call_operand.vmem [shape: f32[1,128], index: 6, kind: input, shape index: {}]
  %s7 = inlined_call_operand.vmem [shape: f32[1,128], index: 7, kind: input, shape index: {}]
  %s8 = inlined_call_operand.hbm [shape: bf16[128,512], index: 8, kind: input, shape index: {}]
  %s9 = inlined_call_operand.vmem [shape: f32[1,512], index: 9, kind: input, shape index: {}]
  %s10 = inlined_call_operand.hbm [shape: bf16[512,128], index: 10, kind: input, shape index: {}]
  %s11 = inlined_call_operand.vmem [shape: f32[1,128], index: 11, kind: input, shape index: {}]
  %s12 = inlined_call_operand.hbm [shape: f32[2,16,128], index: 12, kind: output, shape index: {}]
  %s13 = sld [smem:[#allocation0]]
  $region78: #{tpu_custom_call.1} parent=0
    _
  %s15 = ssub.s32 1, %s13
  %s16 = scalar_select 0, %s15, %s13
  $region1: #{tpu_custom_call.1} parent=0
    #allocation2 [shape = 'u8[16384]{0}', space=vmem, size = 0x4000, scoped, tag = 'input window, operand 0, single buffered']
    #allocation3 [shape = 's32[1]{0}', space=sflag, size = 0x4, scoped, tag = 'scoped memory for tpu_custom_call.1']
    #allocation4 [shape = 's32[1]{0}', space=sflag, size = 0x4, scoped, tag = 'scoped memory for tpu_custom_call.1']
    #allocation5 [shape = 'u8[98304]{0}', space=vmem, size = 0x18000, scoped, tag = 'input window, operand 3, single buffered']
    #allocation6 [shape = 's32[1]{0}', space=sflag, size = 0x4, scoped, tag = 'scoped memory for tpu_custom_call.1']
    #allocation7 [shape = 'u8[32768]{0}', space=vmem, size = 0x8000, scoped, tag = 'input window, operand 4, single buffered']
    #allocation8 [shape = 'u8[131072]{0}', space=vmem, size = 0x20000, scoped, tag = 'input window, operand 8, single buffered']
    #allocation9 [shape = 's32[1]{0}', space=sflag, size = 0x4, scoped, tag = 'scoped memory for tpu_custom_call.1']
    #allocation10 [shape = 'u8[131072]{0}', space=vmem, size = 0x20000, scoped, tag = 'input window, operand 10, single buffered']
    #allocation11 [shape = 'u8[16384]{0}', space=vmem, size = 0x4000, scoped, tag = 'output window, operand 0, single buffered']
    %17 = vsyncpa [#allocation3], 0
    %18 = vsyncpa [#allocation6], 0
    %19 = vsyncpa [#allocation9], 0
    %20 = vsyncpa [#allocation4], 0
    // Predicated region
    $region2: #{tpu_custom_call.1} parent=1 // pred_check
      _
    $region3: #{tpu_custom_call.1} parent=1 // pred_check_branch
      %22 = sbr.rel (0) target = $region5
    $region4: #{tpu_custom_call.1} parent=1 // pred_region
      %s24 = ssub.s32 512, 512
      %25 = vsyncadd [#allocation3], %s24
      %s26 = sshll.u32 [#allocation2], 4
      %s27 = int_to_ptr.vmem [resolvable:$true] %s26
      %32 = dma.hbm_to_vmem [thread:$0]  %s0, 512, %s27, [#allocation3], 128, 128, 8
    $region5: #{tpu_custom_call.1} parent=1 // pred_fallthru
      _
    // Predicated region
    $region6: #{tpu_custom_call.1} parent=1 // pred_check
      _
    $region7: #{tpu_custom_call.1} parent=1 // pred_check_branch
      %34 = sbr.rel (0) target = $region9
    $region8: #{tpu_custom_call.1} parent=1 // pred_region
      _
    $region9: #{tpu_custom_call.1} parent=1 // pred_fallthru
      _
    // Predicated region
    $region10: #{tpu_custom_call.1} parent=1 // pred_check
      _
    $region11: #{tpu_custom_call.1} parent=1 // pred_check_branch
      %36 = sbr.rel (0) target = $region13
    $region12: #{tpu_custom_call.1} parent=1 // pred_region
      _
    $region13: #{tpu_custom_call.1} parent=1 // pred_fallthru
      _
    // Predicated region
    $region14: #{tpu_custom_call.1} parent=1 // pred_check
      _
    $region15: #{tpu_custom_call.1} parent=1 // pred_check_branch
      %38 = sbr.rel (0) target = $region17
    $region16: #{tpu_custom_call.1} parent=1 // pred_region
      %s40 = ssub.s32 3072, 3072
      %41 = vsyncadd [#allocation6], %s40
      %s42 = sshll.u32 [#allocation5], 4
      %s43 = int_to_ptr.vmem [resolvable:$true] %s42
      %48 = dma.hbm_to_vmem [thread:$0]  %s3, 3072, %s43, [#allocation6], 192, 192, 12
    $region17: #{tpu_custom_call.1} parent=1 // pred_fallthru
      _
    // Predicated region
    $region18: #{tpu_custom_call.1} parent=1 // pred_check
      _
    $region19: #{tpu_custom_call.1} parent=1 // pred_check_branch
      %50 = sbr.rel (0) target = $region21
    $region20: #{tpu_custom_call.1} parent=1 // pred_region
      %s52 = ssub.s32 1024, 1024
      %53 = vsyncadd [#allocation6], %s52
      %s54 = sshll.u32 [#allocation7], 4
      %s55 = int_to_ptr.vmem [resolvable:$true] %s54
      %60 = dma.hbm_to_vmem [thread:$0]  %s4, 1024, %s55, [#allocation6], 64, 64, 4
    $region21: #{tpu_custom_call.1} parent=1 // pred_fallthru
      _
    // Predicated region
    $region22: #{tpu_custom_call.1} parent=1 // pred_check
      _
    $region23: #{tpu_custom_call.1} parent=1 // pred_check_branch
      %62 = sbr.rel (0) target = $region25
    $region24: #{tpu_custom_call.1} parent=1 // pred_region
      _
    $region25: #{tpu_custom_call.1} parent=1 // pred_fallthru
      _
    // Predicated region
    $region26: #{tpu_custom_call.1} parent=1 // pred_check
      _
    $region27: #{tpu_custom_call.1} parent=1 // pred_check_branch
      %64 = sbr.rel (0) target = $region29
    $region28: #{tpu_custom_call.1} parent=1 // pred_region
      _
    $region29: #{tpu_custom_call.1} parent=1 // pred_fallthru
      _
    // Predicated region
    $region30: #{tpu_custom_call.1} parent=1 // pred_check
      _
    $region31: #{tpu_custom_call.1} parent=1 // pred_check_branch
      %66 = sbr.rel (0) target = $region33
    $region32: #{tpu_custom_call.1} parent=1 // pred_region
      _
    $region33: #{tpu_custom_call.1} parent=1 // pred_fallthru
      _
    // Predicated region
    $region34: #{tpu_custom_call.1} parent=1 // pred_check
      _
    $region35: #{tpu_custom_call.1} parent=1 // pred_check_branch
      %68 = sbr.rel (0) target = $region37
    $region36: #{tpu_custom_call.1} parent=1 // pred_region
      %s70 = ssub.s32 4096, 4096
      %71 = vsyncadd [#allocation9], %s70
      %s72 = sshll.u32 [#allocation8], 4
      %s73 = int_to_ptr.vmem [resolvable:$true] %s72
      %78 = dma.hbm_to_vmem [thread:$0]  %s8, 4096, %s73, [#allocation9], 256, 256, 16
    $region37: #{tpu_custom_call.1} parent=1 // pred_fallthru
      _
    // Predicated region
    $region38: #{tpu_custom_call.1} parent=1 // pred_check
      _
    $region39: #{tpu_custom_call.1} parent=1 // pred_check_branch
      %80 = sbr.rel (0) target = $region41
    $region40: #{tpu_custom_call.1} parent=1 // pred_region
      _
    $region41: #{tpu_custom_call.1} parent=1 // pred_fallthru
      _
    // Predicated region
    $region42: #{tpu_custom_call.1} parent=1 // pred_check
      _
    $region43: #{tpu_custom_call.1} parent=1 // pred_check_branch
      %82 = sbr.rel (0) target = $region45
    $region44: #{tpu_custom_call.1} parent=1 // pred_region
      %s84 = ssub.s32 4096, 4096
      %85 = vsyncadd [#allocation9], %s84
      %s86 = sshll.u32 [#allocation10], 4
      %s87 = int_to_ptr.vmem [resolvable:$true] %s86
      %92 = dma.hbm_to_vmem [thread:$0]  %s10, 4096, %s87, [#allocation9], 64, 64, 4
    $region45: #{tpu_custom_call.1} parent=1 // pred_fallthru
      _
    // Predicated region
    $region46: #{tpu_custom_call.1} parent=1 // pred_check
      _
    $region47: #{tpu_custom_call.1} parent=1 // pred_check_branch
      %94 = sbr.rel (0) target = $region49
    $region48: #{tpu_custom_call.1} parent=1 // pred_region
      _
    $region49: #{tpu_custom_call.1} parent=1 // pred_fallthru
      _
    // Predicated region
    $region50: #{tpu_custom_call.1} parent=1 // pred_check
      _
    $region51: #{tpu_custom_call.1} parent=1 // pred_check_branch
      %96 = sbr.rel (0) target = $region53
    $region52: #{tpu_custom_call.1} parent=1 // pred_region
      %97 = dma.done [#allocation3], 512
    $region53: #{tpu_custom_call.1} parent=1 // pred_fallthru
      _
    // Predicated region
    $region54: #{tpu_custom_call.1} parent=1 // pred_check
      _
    $region55: #{tpu_custom_call.1} parent=1 // pred_check_branch
      %99 = sbr.rel (0) target = $region57
    $region56: #{tpu_custom_call.1} parent=1 // pred_region
      %100 = dma.done [#allocation6], 3072
    $region57: #{tpu_custom_call.1} parent=1 // pred_fallthru
      _
    // Predicated region
    $region58: #{tpu_custom_call.1} parent=1 // pred_check
      _
    $region59: #{tpu_custom_call.1} parent=1 // pred_check_branch
      %102 = sbr.rel (0) target = $region61
    $region60: #{tpu_custom_call.1} parent=1 // pred_region
      %103 = dma.done [#allocation6], 1024
    $region61: #{tpu_custom_call.1} parent=1 // pred_fallthru
      _
    // Predicated region
    $region62: #{tpu_custom_call.1} parent=1 // pred_check
      _
    $region63: #{tpu_custom_call.1} parent=1 // pred_check_branch
      %105 = sbr.rel (0) target = $region65
    $region64: #{tpu_custom_call.1} parent=1 // pred_region
      %106 = dma.done [#allocation9], 4096
    $region65: #{tpu_custom_call.1} parent=1 // pred_fallthru
      _
    // Predicated region
    $region66: #{tpu_custom_call.1} parent=1 // pred_check
      _
    $region67: #{tpu_custom_call.1} parent=1 // pred_check_branch
      %108 = sbr.rel (0) target = $region69
    $region68: #{tpu_custom_call.1} parent=1 // pred_region
      %109 = dma.done [#allocation9], 4096
    $region69: #{tpu_custom_call.1} parent=1 // pred_fallthru
      _
    %v111 = vld [vmem:[#allocation2] sm:$0xff]
    %v112 = vld [vmem:[#allocation2 + $0x8] sm:$0xff]
    %v113 = vld [vmem:[#allocation2 + $0x10] sm:$0xff]
    %v114 = vld [vmem:[#allocation2 + $0x18] sm:$0xff]
    %v115 = vld [vmem:[%s1] sm:$0x1]
    %v116 = vld [vmem:[%s2] sm:$0x1]
    %117 = vadd.xlane.f32.xlu0 %v111
    %v118 = vpop.xlane.xlu0 %117
    %119 = vadd.xlane.f32.xlu0 %v112
    %v120 = vpop.xlane.xlu0 %119
    %121 = vadd.xlane.f32.xlu0 %v113
    %v122 = vpop.xlane.xlu0 %121
    %123 = vadd.xlane.f32.xlu0 %v114
    %v124 = vpop.xlane.xlu0 %123
    %v125 = vrcp.pop 128.0
    %v126 = vmul.f32 %v118, %v125
    %v127 = vmul.f32 %v120, %v125
    %v128 = vmul.f32 %v122, %v125
    %v129 = vmul.f32 %v124, %v125
    %v130 = vsub.f32 %v111, %v126
    %v131 = vsub.f32 %v112, %v127
    %v132 = vsub.f32 %v113, %v128
    %v133 = vsub.f32 %v114, %v129
    %v134 = vmul.f32 %v130, %v130
    %v135 = vmul.f32 %v131, %v131
    %v136 = vmul.f32 %v132, %v132
    %v137 = vmul.f32 %v133, %v133
    %138 = vadd.xlane.f32.xlu0 %v134
    %v139 = vpop.xlane.xlu0 %138
    %140 = vadd.xlane.f32.xlu0 %v135
    %v141 = vpop.xlane.xlu0 %140
    %142 = vadd.xlane.f32.xlu0 %v136
    %v143 = vpop.xlane.xlu0 %142
    %144 = vadd.xlane.f32.xlu0 %v137
    %v145 = vpop.xlane.xlu0 %144
    %v146 = vmul.f32 %v139, %v125
    %v147 = vmul.f32 %v141, %v125
    %v148 = vmul.f32 %v143, %v125
    %v149 = vmul.f32 %v145, %v125
    %v150 = vadd.f32 %v146, 1e-05
    %v151 = vadd.f32 %v147, 1e-05
    %v152 = vadd.f32 %v148, 1e-05
    %v153 = vadd.f32 %v149, 1e-05
    %v154 = vrsqrt.pop %v150
    %v155 = vrsqrt.pop %v151
    %v156 = vrsqrt.pop %v152
    %v157 = vrsqrt.pop %v153
    %v158 = vmul.f32 %v130, %v154
    %v159 = vmul.f32 %v131, %v155
    %v160 = vmul.f32 %v132, %v156
    %v161 = vmul.f32 %v133, %v157
    %v163 = vlaneseq
    %v164 = vshrl.u32 %v163, 7
    %v165 = vsub.s32 0, %v164
    %v166 = vrot.slane %v115, %v165
    %v168 = vmul.f32 %v158, %v166
    %v169 = vmul.f32 %v159, %v166
    %v170 = vmul.f32 %v160, %v166
    %v171 = vmul.f32 %v161, %v166
    %v173 = vlaneseq
    %v174 = vshrl.u32 %v173, 7
    %v175 = vsub.s32 0, %v174
    %v176 = vrot.slane %v116, %v175
    %v178 = vadd.f32 %v168, %v176
    %v179 = vadd.f32 %v169, %v176
    %v180 = vadd.f32 %v170, %v176
    %v181 = vadd.f32 %v171, %v176
    %v182 = vpack.c.bf16 %v179, %v178
    %v183 = vpack.c.bf16 %v181, %v180
    %v184 = vld [vmem:[#allocation5] sm:$0xff]
    %v185 = vld [vmem:[#allocation5 + $0x8] sm:$0xf]
    %v186 = vld [vmem:[#allocation5 + $0xc] sm:$0xff]
    %v187 = vld [vmem:[#allocation5 + $0x14] sm:$0xf]
    %v188 = vld [vmem:[#allocation5 + $0x18] sm:$0xff]
    %v189 = vld [vmem:[#allocation5 + $0x20] sm:$0xf]
    %v190 = vld [vmem:[#allocation5 + $0x24] sm:$0xff]
    %v191 = vld [vmem:[#allocation5 + $0x2c] sm:$0xf]
    %v192 = vld [vmem:[#allocation5 + $0x30] sm:$0xff]
    %v193 = vld [vmem:[#allocation5 + $0x38] sm:$0xf]
    %v194 = vld [vmem:[#allocation5 + $0x3c] sm:$0xff]
    %v195 = vld [vmem:[#allocation5 + $0x44] sm:$0xf]
    %v196 = vld [vmem:[#allocation5 + $0x48] sm:$0xff]
    %v197 = vld [vmem:[#allocation5 + $0x50] sm:$0xf]
    %v198 = vld [vmem:[#allocation5 + $0x54] sm:$0xff]
    %v199 = vld [vmem:[#allocation5 + $0x5c] sm:$0xf]
    %v200 = vld [vmem:[#allocation5 + $0x60] sm:$0xff]
    %v201 = vld [vmem:[#allocation5 + $0x68] sm:$0xf]
    %v202 = vld [vmem:[#allocation5 + $0x6c] sm:$0xff]
    %v203 = vld [vmem:[#allocation5 + $0x74] sm:$0xf]
    %v204 = vld [vmem:[#allocation5 + $0x78] sm:$0xff]
    %v205 = vld [vmem:[#allocation5 + $0x80] sm:$0xf]
    %v206 = vld [vmem:[#allocation5 + $0x84] sm:$0xff]
    %v207 = vld [vmem:[#allocation5 + $0x8c] sm:$0xf]
    %v208 = vld [vmem:[#allocation5 + $0x90] sm:$0xff]
    %v209 = vld [vmem:[#allocation5 + $0x98] sm:$0xf]
    %v210 = vld [vmem:[#allocation5 + $0x9c] sm:$0xff]
    %v211 = vld [vmem:[#allocation5 + $0xa4] sm:$0xf]
    %v212 = vld [vmem:[#allocation5 + $0xa8] sm:$0xff]
    %v213 = vld [vmem:[#allocation5 + $0xb0] sm:$0xf]
    %v214 = vld [vmem:[#allocation5 + $0xb4] sm:$0xff]
    %v215 = vld [vmem:[#allocation5 + $0xbc] sm:$0xf]
    %v248 = vunpack.c.l.b16 %v184
    %v249 = vunpack.c.h.b16 %v184
    %v250 = vunpack.c.l.b16 %v185
    %v251 = vunpack.c.l.b16 %v186
    %v252 = vunpack.c.h.b16 %v186
    %v253 = vunpack.c.l.b16 %v187
    %v254 = vunpack.c.l.b16 %v188
    %v255 = vunpack.c.h.b16 %v188
    %v256 = vunpack.c.l.b16 %v189
    %v257 = vunpack.c.l.b16 %v190
    %v258 = vunpack.c.h.b16 %v190
    %v259 = vunpack.c.l.b16 %v191
    %v260 = vunpack.c.l.b16 %v192
    %v261 = vunpack.c.h.b16 %v192
    %v262 = vunpack.c.l.b16 %v193
    %v263 = vunpack.c.l.b16 %v194
    %v264 = vunpack.c.h.b16 %v194
    %v265 = vunpack.c.l.b16 %v195
    %v266 = vunpack.c.l.b16 %v196
    %v267 = vunpack.c.h.b16 %v196
    %v268 = vunpack.c.l.b16 %v197
    %v269 = vunpack.c.l.b16 %v198
    %v270 = vunpack.c.h.b16 %v198
    %v271 = vunpack.c.l.b16 %v199
    %v272 = vunpack.c.l.b16 %v200
    %v273 = vunpack.c.h.b16 %v200
    %v274 = vunpack.c.l.b16 %v201
    %v275 = vunpack.c.l.b16 %v202
    %v276 = vunpack.c.h.b16 %v202
    %v277 = vunpack.c.l.b16 %v203
    %v278 = vunpack.c.l.b16 %v204
    %v279 = vunpack.c.h.b16 %v204
    %v280 = vunpack.c.l.b16 %v205
    %v281 = vunpack.c.l.b16 %v206
    %v282 = vunpack.c.h.b16 %v206
    %v283 = vunpack.c.l.b16 %v207
    %v284 = vunpack.c.l.b16 %v208
    %v285 = vunpack.c.h.b16 %v208
    %v286 = vunpack.c.l.b16 %v209
    %v287 = vunpack.c.l.b16 %v210
    %v288 = vunpack.c.h.b16 %v210
    %v289 = vunpack.c.l.b16 %v211
    %v290 = vunpack.c.l.b16 %v212
    %v291 = vunpack.c.h.b16 %v212
    %v292 = vunpack.c.l.b16 %v213
    %v293 = vunpack.c.l.b16 %v214
    %v294 = vunpack.c.h.b16 %v214
    %v295 = vunpack.c.l.b16 %v215
    %v296 = vpack.c.b16 %v251, %v248
    %v297 = vpack.c.b16 %v252, %v249
    %v298 = vpack.c.b16 %v253, %v250
    %v299 = vpack.c.b16 %v257, %v254
    %v300 = vpack.c.b16 %v258, %v255
    %v301 = vpack.c.b16 %v259, %v256
    %v302 = vpack.c.b16 %v263, %v260
    %v303 = vpack.c.b16 %v264, %v261
    %v304 = vpack.c.b16 %v265, %v262
    %v305 = vpack.c.b16 %v269, %v266
    %v306 = vpack.c.b16 %v270, %v267
    %v307 = vpack.c.b16 %v271, %v268
    %v308 = vpack.c.b16 %v275, %v272
    %v309 = vpack.c.b16 %v276, %v273
    %v310 = vpack.c.b16 %v277, %v274
    %v311 = vpack.c.b16 %v281, %v278
    %v312 = vpack.c.b16 %v282, %v279
    %v313 = vpack.c.b16 %v283, %v280
    %v314 = vpack.c.b16 %v287, %v284
    %v315 = vpack.c.b16 %v288, %v285
    %v316 = vpack.c.b16 %v289, %v286
    %v317 = vpack.c.b16 %v293, %v290
    %v318 = vpack.c.b16 %v294, %v291
    %v319 = vpack.c.b16 %v295, %v292
    %344 = vmatprep.subr.bf16.mxu0 %v318
    %345 = vmatpush1.bf16.msra.mxu0 %v317
    %346 = vmatprep.subr.bf16.mxu0 %v315
    %347 = vmatpush1.bf16.msra.mxu0 %v314
    %348 = vmatprep.subr.bf16.mxu0 %v312
    %349 = vmatpush1.bf16.msra.mxu0 %v311
    %350 = vmatprep.subr.bf16.mxu0 %v309
    %351 = vmatpush1.bf16.msra.mxu0 %v308
    %352 = vmatprep.subr.bf16.mxu0 %v306
    %353 = vmatpush1.bf16.msra.mxu0 %v305
    %354 = vmatprep.subr.bf16.mxu0 %v303
    %355 = vmatpush1.bf16.msra.mxu0 %v302
    %356 = vmatprep.subr.bf16.mxu0 %v300
    %357 = vmatpush1.bf16.msra.mxu0 %v299
    %358 = vmatprep.subr.bf16.mxu0 %v297
    %359 = vmatpush1.bf16.msra.mxu0 %v296
    %360 = vmatprep.subr.bf16.mxu0 0
    %361 = vmatpush2.bf16.msra.mxu0 0
    %362 = vmatprep.subr.bf16.mxu0 0
    %363 = vmatpush2.bf16.msra.mxu0 0
    %364 = vmatprep.subr.bf16.mxu0 0
    %365 = vmatpush2.bf16.msra.mxu0 0
    %366 = vmatprep.subr.bf16.mxu0 0
    %367 = vmatpush2.bf16.msra.mxu0 0
    %368 = vmatprep.subr.bf16.mxu0 0
    %369 = vmatpush2.bf16.msra.mxu0 0
    %370 = vmatprep.subr.bf16.mxu0 0
    %371 = vmatpush2.bf16.msra.mxu0 0
    %372 = vmatprep.subr.bf16.mxu0 0
    %373 = vmatpush2.bf16.msra.mxu0 0
    %374 = vmatprep.subr.bf16.mxu0 0
    %375 = vmatpush2.bf16.msra.mxu0 0
    %376 = vmatprep.mubr.bf16.mxu0 0
    %377 = vmatmul.mubr.bf16.gmra.mxu0 %v182
    %v378 = vpop.f32.mrf.mxu0
    %v379 = vadd.f32 0.0, %v378
    %v380 = vpop.f32.mrf.mxu0
    %v381 = vadd.f32 0.0, %v380
    %v382 = vpop.f32.mrf.mxu0
    %v383 = vadd.f32 0.0, %v382
    %v384 = vpop.f32.mrf.mxu0
    %v385 = vadd.f32 0.0, %v384
    %386 = vmatprep.mubr.bf16.mxu0 0
    %387 = vmatmul.mubr.bf16.gmra.mxu0 %v183
    %v388 = vpop.f32.mrf.mxu0
    %v389 = vadd.f32 0.0, %v388
    %v390 = vpop.f32.mrf.mxu0
    %v391 = vadd.f32 0.0, %v390
    %v392 = vpop.f32.mrf.mxu0
    %v393 = vadd.f32 0.0, %v392
    %v394 = vpop.f32.mrf.mxu0
    %v395 = vadd.f32 0.0, %v394
    %396 = vdwg.mxu0
    %397 = vmatprep.subr.bf16.mxu0 0
    %398 = vmatpush1.bf16.msra.mxu0 %v319
    %399 = vmatprep.subr.bf16.mxu0 0
    %400 = vmatpush1.bf16.msra.mxu0 %v316
    %401 = vmatprep.subr.bf16.mxu0 0
    %402 = vmatpush1.bf16.msra.mxu0 %v313
    %403 = vmatprep.subr.bf16.mxu0 0
    %404 = vmatpush1.bf16.msra.mxu0 %v310
    %405 = vmatprep.subr.bf16.mxu0 0
    %406 = vmatpush1.bf16.msra.mxu0 %v307
    %407 = vmatprep.subr.bf16.mxu0 0
    %408 = vmatpush1.bf16.msra.mxu0 %v304
    %409 = vmatprep.subr.bf16.mxu0 0
    %410 = vmatpush1.bf16.msra.mxu0 %v301
    %411 = vmatprep.subr.bf16.mxu0 0
    %412 = vmatpush1.bf16.msra.mxu0 %v298
    %413 = vmatprep.subr.bf16.mxu0 0
    %414 = vmatpush2.bf16.msra.mxu0 0
    %415 = vmatprep.subr.bf16.mxu0 0
    %416 = vmatpush2.bf16.msra.mxu0 0
    %417 = vmatprep.subr.bf16.mxu0 0
    %418 = vmatpush2.bf16.msra.mxu0 0
    %419 = vmatprep.subr.bf16.mxu0 0
    %420 = vmatpush2.bf16.msra.mxu0 0
    %421 = vmatprep.subr.bf16.mxu0 0
    %422 = vmatpush2.bf16.msra.mxu0 0
    %423 = vmatprep.subr.bf16.mxu0 0
    %424 = vmatpush2.bf16.msra.mxu0 0
    %425 = vmatprep.subr.bf16.mxu0 0
    %426 = vmatpush2.bf16.msra.mxu0 0
    %427 = vmatprep.subr.bf16.mxu0 0
    %428 = vmatpush2.bf16.msra.mxu0 0
    %429 = vmatprep.mubr.bf16.mxu0 0
    %430 = vmatmul.mubr.bf16.gmra.mxu0 %v182
    %v431 = vpop.f32.mrf.mxu0
    %v432 = vadd.f32 0.0, %v431
    %v433 = vpop.f32.mrf.mxu0
    %v434 = vpop.f32.mrf.mxu0
    %v435 = vadd.f32 0.0, %v434
    %v436 = vpop.f32.mrf.mxu0
    %437 = vmatprep.mubr.bf16.mxu0 0
    %438 = vmatmul.mubr.bf16.gmra.mxu0 %v183
    %v439 = vpop.f32.mrf.mxu0
    %v440 = vadd.f32 0.0, %v439
    %v441 = vpop.f32.mrf.mxu0
    %v442 = vpop.f32.mrf.mxu0
    %v443 = vadd.f32 0.0, %v442
    %v444 = vpop.f32.mrf.mxu0
    %445 = vdwg.mxu0
    %v446 = vlaneseq
    %v447 = vshrl.u32 %v446, 7
    %v448 = vadd.s32 %v447, 8
    %v449 = vlaneseq
    %v450 = vand.u32 %v449, 127
    %vm451 = vcmp.ge.s32.totalorder %v447, %v450
    %vm452 = vcmp.ge.s32.totalorder %v448, %v450
    %v453 = vpack.c.bf16 %v383, %v379
    %v454 = vpack.c.bf16 %v393, %v389
    %v455 = vpack.c.bf16 %v385, %v381
    %v456 = vpack.c.bf16 %v395, %v391
    %vm457 = vcmask 261120
    %v459 = vsel %vm457, %v453, 0
    %v462 = vsel %vm457, %v455, 0
    %464 = vmatprep.subr.bf16.mxu0 0
    %465 = vmatpush1.bf16.xpose.msra.mxu0 0
    %466 = vmatprep.subr.bf16.mxu0 0
    %467 = vmatpush1.bf16.xpose.msra.mxu0 0
    %468 = vmatprep.subr.bf16.mxu0 0
    %469 = vmatpush1.bf16.xpose.msra.mxu0 0
    %470 = vmatprep.subr.bf16.mxu0 0
    %471 = vmatpush1.bf16.xpose.msra.mxu0 0
    %472 = vmatprep.subr.bf16.mxu0 0
    %473 = vmatpush1.bf16.xpose.msra.mxu0 0
    %474 = vmatprep.subr.bf16.mxu0 0
    %475 = vmatpush1.bf16.xpose.msra.mxu0 0
    %476 = vmatprep.subr.bf16.mxu0 0
    %477 = vmatpush1.bf16.xpose.msra.mxu0 0
    %478 = vmatprep.subr.bf16.mxu0 0
    %479 = vmatpush1.bf16.xpose.msra.mxu0 %v462
    %480 = vmatprep.subr.bf16.mxu0 0
    %481 = vmatpush2.bf16.xpose.msra.mxu0 0
    %482 = vmatprep.subr.bf16.mxu0 0
    %483 = vmatpush2.bf16.xpose.msra.mxu0 0
    %484 = vmatprep.subr.bf16.mxu0 0
    %485 = vmatpush2.bf16.xpose.msra.mxu0 0
    %486 = vmatprep.subr.bf16.mxu0 0
    %487 = vmatpush2.bf16.xpose.msra.mxu0 0
    %488 = vmatprep.subr.bf16.mxu0 0
    %489 = vmatpush2.bf16.xpose.msra.mxu0 0
    %490 = vmatprep.subr.bf16.mxu0 0
    %491 = vmatpush2.bf16.xpose.msra.mxu0 0
    %492 = vmatprep.subr.bf16.mxu0 0
    %493 = vmatpush2.bf16.xpose.msra.mxu0 0
    %494 = vmatprep.subr.bf16.mxu0 0
    %495 = vmatpush2.bf16.xpose.msra.mxu0 0
    %496 = vmatprep.mubr.bf16.mxu0 0
    %497 = vmatmul.mubr.bf16.gmra.mxu0 %v459
    %v498 = vpop.f32.mrf.mxu0
    %v499 = vadd.f32 0.0, %v498
    %v500 = vpop.f32.mrf.mxu0
    %v501 = vpop.f32.mrf.mxu0
    %v502 = vadd.f32 0.0, %v501
    %v503 = vpop.f32.mrf.mxu0
    %504 = vdwg.mxu0
    %v506 = vsel %vm457, %v454, 0
    %v509 = vsel %vm457, %v456, 0
    %511 = vmatprep.subr.bf16.mxu0 0
    %512 = vmatpush1.bf16.xpose.msra.mxu0 0
    %513 = vmatprep.subr.bf16.mxu0 0
    %514 = vmatpush1.bf16.xpose.msra.mxu0 0
    %515 = vmatprep.subr.bf16.mxu0 0
    %516 = vmatpush1.bf16.xpose.msra.mxu0 0
    %517 = vmatprep.subr.bf16.mxu0 0
    %518 = vmatpush1.bf16.xpose.msra.mxu0 0
    %519 = vmatprep.subr.bf16.mxu0 0
    %520 = vmatpush1.bf16.xpose.msra.mxu0 0
    %521 = vmatprep.subr.bf16.mxu0 0
    %522 = vmatpush1.bf16.xpose.msra.mxu0 0
    %523 = vmatprep.subr.bf16.mxu0 0
    %524 = vmatpush1.bf16.xpose.msra.mxu0 0
    %525 = vmatprep.subr.bf16.mxu0 0
    %526 = vmatpush1.bf16.xpose.msra.mxu0 %v509
    %527 = vmatprep.subr.bf16.mxu0 0
    %528 = vmatpush2.bf16.xpose.msra.mxu0 0
    %529 = vmatprep.subr.bf16.mxu0 0
    %530 = vmatpush2.bf16.xpose.msra.mxu0 0
    %531 = vmatprep.subr.bf16.mxu0 0
    %532 = vmatpush2.bf16.xpose.msra.mxu0 0
    %533 = vmatprep.subr.bf16.mxu0 0
    %534 = vmatpush2.bf16.xpose.msra.mxu0 0
    %535 = vmatprep.subr.bf16.mxu0 0
    %536 = vmatpush2.bf16.xpose.msra.mxu0 0
    %537 = vmatprep.subr.bf16.mxu0 0
    %538 = vmatpush2.bf16.xpose.msra.mxu0 0
    %539 = vmatprep.subr.bf16.mxu0 0
    %540 = vmatpush2.bf16.xpose.msra.mxu0 0
    %541 = vmatprep.subr.bf16.mxu0 0
    %542 = vmatpush2.bf16.xpose.msra.mxu0 0
    %543 = vmatprep.mubr.bf16.mxu0 0
    %544 = vmatmul.mubr.bf16.gmra.mxu0 %v506
    %v545 = vpop.f32.mrf.mxu0
    %v546 = vadd.f32 0.0, %v545
    %v547 = vpop.f32.mrf.mxu0
    %v548 = vpop.f32.mrf.mxu0
    %v549 = vadd.f32 0.0, %v548
    %v550 = vpop.f32.mrf.mxu0
    %551 = vdwg.mxu0
    %v552 = vmul.f32 %v499, 0.088388346
    %v553 = vmul.f32 %v502, 0.088388346
    %v554 = vmul.f32 %v546, 0.088388346
    %v555 = vmul.f32 %v549, 0.088388346
    %v556 = vsel %vm451, %v552, -1e+30
    %v557 = vsel %vm452, %v553, -1e+30
    %v558 = vsel %vm451, %v554, -1e+30
    %v559 = vsel %vm452, %v555, -1e+30
    %vm560 = vcmask 130048
    %v561 = vsel %vm560, %v556, -inf
    %562 = vmax.xlane.f32.xlu0 %v561
    %v563 = vpop.xlane.xlu0 %562
    %v564 = vsel %vm560, %v557, -inf
    %565 = vmax.xlane.f32.xlu0 %v564
    %v566 = vpop.xlane.xlu0 %565
    %v567 = vsel %vm560, %v558, -inf
    %568 = vmax.xlane.f32.xlu0 %v567
    %v569 = vpop.xlane.xlu0 %568
    %v570 = vsel %vm560, %v559, -inf
    %571 = vmax.xlane.f32.xlu0 %v570
    %v572 = vpop.xlane.xlu0 %571
    %v573 = vsub.f32 %v556, %v563
    %v574 = vsub.f32 %v557, %v566
    %v575 = vsub.f32 %v558, %v569
    %v576 = vsub.f32 %v559, %v572
    %v577 = vmul.f32 %v573, 1.442695
    %v578 = vpow.pop %v577
    %v579 = vmul.f32 %v574, 1.442695
    %v580 = vpow.pop %v579
    %v581 = vmul.f32 %v575, 1.442695
    %v582 = vpow.pop %v581
    %v583 = vmul.f32 %v576, 1.442695
    %v584 = vpow.pop %v583
    %v585 = vsel %vm560, %v578, 0.0
    %586 = vadd.xlane.f32.xlu0 %v585
    %v587 = vpop.xlane.xlu0 %586
    %v588 = vsel %vm560, %v580, 0.0
    %589 = vadd.xlane.f32.xlu0 %v588
    %v590 = vpop.xlane.xlu0 %589
    %v591 = vsel %vm560, %v582, 0.0
    %592 = vadd.xlane.f32.xlu0 %v591
    %v593 = vpop.xlane.xlu0 %592
    %v594 = vsel %vm560, %v584, 0.0
    %595 = vadd.xlane.f32.xlu0 %v594
    %v596 = vpop.xlane.xlu0 %595
    %v597 = vpack.c.bf16 %v580, %v578
    %v598 = vpack.c.bf16 %v584, %v582
    %v599 = vpack.c.bf16 %v435, %v432
    %v600 = vpack.c.bf16 %v443, %v440
    %v602 = vsel %vm560, %v597, 0
    %604 = vmatprep.subr.bf16.mxu0 0
    %605 = vmatpush1.bf16.msra.mxu0 0
    %606 = vmatprep.subr.bf16.mxu0 0
    %607 = vmatpush1.bf16.msra.mxu0 0
    %608 = vmatprep.subr.bf16.mxu0 0
    %609 = vmatpush1.bf16.msra.mxu0 0
    %610 = vmatprep.subr.bf16.mxu0 0
    %611 = vmatpush1.bf16.msra.mxu0 0
    %612 = vmatprep.subr.bf16.mxu0 0
    %613 = vmatpush1.bf16.msra.mxu0 0
    %614 = vmatprep.subr.bf16.mxu0 0
    %615 = vmatpush1.bf16.msra.mxu0 0
    %616 = vmatprep.subr.bf16.mxu0 0
    %617 = vmatpush1.bf16.msra.mxu0 0
    %618 = vmatprep.subr.bf16.mxu0 0
    %619 = vmatpush1.bf16.msra.mxu0 %v599
    %620 = vmatprep.subr.bf16.mxu0 0
    %621 = vmatpush2.bf16.msra.mxu0 0
    %622 = vmatprep.subr.bf16.mxu0 0
    %623 = vmatpush2.bf16.msra.mxu0 0
    %624 = vmatprep.subr.bf16.mxu0 0
    %625 = vmatpush2.bf16.msra.mxu0 0
    %626 = vmatprep.subr.bf16.mxu0 0
    %627 = vmatpush2.bf16.msra.mxu0 0
    %628 = vmatprep.subr.bf16.mxu0 0
    %629 = vmatpush2.bf16.msra.mxu0 0
    %630 = vmatprep.subr.bf16.mxu0 0
    %631 = vmatpush2.bf16.msra.mxu0 0
    %632 = vmatprep.subr.bf16.mxu0 0
    %633 = vmatpush2.bf16.msra.mxu0 0
    %634 = vmatprep.subr.bf16.mxu0 0
    %635 = vmatpush2.bf16.msra.mxu0 0
    %636 = vmatprep.mubr.bf16.mxu0 0
    %637 = vmatmul.mubr.bf16.gmra.mxu0 %v602
    %v638 = vpop.f32.mrf.mxu0
    %v639 = vadd.f32 0.0, %v638
    %v640 = vpop.f32.mrf.mxu0
    %v641 = vpop.f32.mrf.mxu0
    %v642 = vadd.f32 0.0, %v641
    %v643 = vpop.f32.mrf.mxu0
    %644 = vdwg.mxu0
    %v646 = vsel %vm560, %v598, 0
    %648 = vmatprep.subr.bf16.mxu0 0
    %649 = vmatpush1.bf16.msra.mxu0 0
    %650 = vmatprep.subr.bf16.mxu0 0
    %651 = vmatpush1.bf16.msra.mxu0 0
    %652 = vmatprep.subr.bf16.mxu0 0
    %653 = vmatpush1.bf16.msra.mxu0 0
    %654 = vmatprep.subr.bf16.mxu0 0
    %655 = vmatpush1.bf16.msra.mxu0 0
    %656 = vmatprep.subr.bf16.mxu0 0
    %657 = vmatpush1.bf16.msra.mxu0 0
    %658 = vmatprep.subr.bf16.mxu0 0
    %659 = vmatpush1.bf16.msra.mxu0 0
    %660 = vmatprep.subr.bf16.mxu0 0
    %661 = vmatpush1.bf16.msra.mxu0 0
    %662 = vmatprep.subr.bf16.mxu0 0
    %663 = vmatpush1.bf16.msra.mxu0 %v600
    %664 = vmatprep.subr.bf16.mxu0 0
    %665 = vmatpush2.bf16.msra.mxu0 0
    %666 = vmatprep.subr.bf16.mxu0 0
    %667 = vmatpush2.bf16.msra.mxu0 0
    %668 = vmatprep.subr.bf16.mxu0 0
    %669 = vmatpush2.bf16.msra.mxu0 0
    %670 = vmatprep.subr.bf16.mxu0 0
    %671 = vmatpush2.bf16.msra.mxu0 0
    %672 = vmatprep.subr.bf16.mxu0 0
    %673 = vmatpush2.bf16.msra.mxu0 0
    %674 = vmatprep.subr.bf16.mxu0 0
    %675 = vmatpush2.bf16.msra.mxu0 0
    %676 = vmatprep.subr.bf16.mxu0 0
    %677 = vmatpush2.bf16.msra.mxu0 0
    %678 = vmatprep.subr.bf16.mxu0 0
    %679 = vmatpush2.bf16.msra.mxu0 0
    %680 = vmatprep.mubr.bf16.mxu0 0
    %681 = vmatmul.mubr.bf16.gmra.mxu0 %v646
    %v682 = vpop.f32.mrf.mxu0
    %v683 = vadd.f32 0.0, %v682
    %v684 = vpop.f32.mrf.mxu0
    %v685 = vpop.f32.mrf.mxu0
    %v686 = vadd.f32 0.0, %v685
    %v687 = vpop.f32.mrf.mxu0
    %688 = vdwg.mxu0
    %v689 = vrcp.pop %v587
    %v690 = vrcp.pop %v590
    %v691 = vrcp.pop %v593
    %v692 = vrcp.pop %v596
    %v693 = vmul.f32 %v639, %v689
    %v694 = vmul.f32 %v642, %v690
    %v695 = vmul.f32 %v683, %v691
    %v696 = vmul.f32 %v686, %v692
    %698 = vrot.lane.b32.xlu0 %v453, 96
    %v699 = vpop.permute.xlu0 %698
    %701 = vrot.lane.b32.xlu0 %v455, 96
    %v702 = vpop.permute.xlu0 %701
    %v704 = vsel %vm457, %v699, 0
    %v707 = vsel %vm457, %v702, 0
    %709 = vmatprep.subr.bf16.mxu0 0
    %710 = vmatpush1.bf16.xpose.msra.mxu0 0
    %711 = vmatprep.subr.bf16.mxu0 0
    %712 = vmatpush1.bf16.xpose.msra.mxu0 0
    %713 = vmatprep.subr.bf16.mxu0 0
    %714 = vmatpush1.bf16.xpose.msra.mxu0 0
    %715 = vmatprep.subr.bf16.mxu0 0
    %716 = vmatpush1.bf16.xpose.msra.mxu0 0
    %717 = vmatprep.subr.bf16.mxu0 0
    %718 = vmatpush1.bf16.xpose.msra.mxu0 0
    %719 = vmatprep.subr.bf16.mxu0 0
    %720 = vmatpush1.bf16.xpose.msra.mxu0 0
    %721 = vmatprep.subr.bf16.mxu0 0
    %722 = vmatpush1.bf16.xpose.msra.mxu0 0
    %723 = vmatprep.subr.bf16.mxu0 0
    %724 = vmatpush1.bf16.xpose.msra.mxu0 %v707
    %725 = vmatprep.subr.bf16.mxu0 0
    %726 = vmatpush2.bf16.xpose.msra.mxu0 0
    %727 = vmatprep.subr.bf16.mxu0 0
    %728 = vmatpush2.bf16.xpose.msra.mxu0 0
    %729 = vmatprep.subr.bf16.mxu0 0
    %730 = vmatpush2.bf16.xpose.msra.mxu0 0
    %731 = vmatprep.subr.bf16.mxu0 0
    %732 = vmatpush2.bf16.xpose.msra.mxu0 0
    %733 = vmatprep.subr.bf16.mxu0 0
    %734 = vmatpush2.bf16.xpose.msra.mxu0 0
    %735 = vmatprep.subr.bf16.mxu0 0
    %736 = vmatpush2.bf16.xpose.msra.mxu0 0
    %737 = vmatprep.subr.bf16.mxu0 0
    %738 = vmatpush2.bf16.xpose.msra.mxu0 0
    %739 = vmatprep.subr.bf16.mxu0 0
    %740 = vmatpush2.bf16.xpose.msra.mxu0 0
    %741 = vmatprep.mubr.bf16.mxu0 0
    %742 = vmatmul.mubr.bf16.gmra.mxu0 %v704
    %v743 = vpop.f32.mrf.mxu0
    %v744 = vadd.f32 0.0, %v743
    %v745 = vpop.f32.mrf.mxu0
    %v746 = vpop.f32.mrf.mxu0
    %v747 = vadd.f32 0.0, %v746
    %v748 = vpop.f32.mrf.mxu0
    %749 = vdwg.mxu0
    %751 = vrot.lane.b32.xlu0 %v454, 96
    %v752 = vpop.permute.xlu0 %751
    %754 = vrot.lane.b32.xlu0 %v456, 96
    %v755 = vpop.permute.xlu0 %754
    %v757 = vsel %vm457, %v752, 0
    %v760 = vsel %vm457, %v755, 0
    %762 = vmatprep.subr.bf16.mxu0 0
    %763 = vmatpush1.bf16.xpose.msra.mxu0 0
    %764 = vmatprep.subr.bf16.mxu0 0
    %765 = vmatpush1.bf16.xpose.msra.mxu0 0
    %766 = vmatprep.subr.bf16.mxu0 0
    %767 = vmatpush1.bf16.xpose.msra.mxu0 0
    %768 = vmatprep.subr.bf16.mxu0 0
    %769 = vmatpush1.bf16.xpose.msra.mxu0 0
    %770 = vmatprep.subr.bf16.mxu0 0
    %771 = vmatpush1.bf16.xpose.msra.mxu0 0
    %772 = vmatprep.subr.bf16.mxu0 0
    %773 = vmatpush1.bf16.xpose.msra.mxu0 0
    %774 = vmatprep.subr.bf16.mxu0 0
    %775 = vmatpush1.bf16.xpose.msra.mxu0 0
    %776 = vmatprep.subr.bf16.mxu0 0
    %777 = vmatpush1.bf16.xpose.msra.mxu0 %v760
    %778 = vmatprep.subr.bf16.mxu0 0
    %779 = vmatpush2.bf16.xpose.msra.mxu0 0
    %780 = vmatprep.subr.bf16.mxu0 0
    %781 = vmatpush2.bf16.xpose.msra.mxu0 0
    %782 = vmatprep.subr.bf16.mxu0 0
    %783 = vmatpush2.bf16.xpose.msra.mxu0 0
    %784 = vmatprep.subr.bf16.mxu0 0
    %785 = vmatpush2.bf16.xpose.msra.mxu0 0
    %786 = vmatprep.subr.bf16.mxu0 0
    %787 = vmatpush2.bf16.xpose.msra.mxu0 0
    %788 = vmatprep.subr.bf16.mxu0 0
    %789 = vmatpush2.bf16.xpose.msra.mxu0 0
    %790 = vmatprep.subr.bf16.mxu0 0
    %791 = vmatpush2.bf16.xpose.msra.mxu0 0
    %792 = vmatprep.subr.bf16.mxu0 0
    %793 = vmatpush2.bf16.xpose.msra.mxu0 0
    %794 = vmatprep.mubr.bf16.mxu0 0
    %795 = vmatmul.mubr.bf16.gmra.mxu0 %v757
    %v796 = vpop.f32.mrf.mxu0
    %v797 = vadd.f32 0.0, %v796
    %v798 = vpop.f32.mrf.mxu0
    %v799 = vpop.f32.mrf.mxu0
    %v800 = vadd.f32 0.0, %v799
    %v801 = vpop.f32.mrf.mxu0
    %802 = vdwg.mxu0
    %v803 = vmul.f32 %v744, 0.088388346
    %v804 = vmul.f32 %v747, 0.088388346
    %v805 = vmul.f32 %v797, 0.088388346
    %v806 = vmul.f32 %v800, 0.088388346
    %v807 = vsel %vm451, %v803, -1e+30
    %v808 = vsel %vm452, %v804, -1e+30
    %v809 = vsel %vm451, %v805, -1e+30
    %v810 = vsel %vm452, %v806, -1e+30
    %v811 = vsel %vm560, %v807, -inf
    %812 = vmax.xlane.f32.xlu0 %v811
    %v813 = vpop.xlane.xlu0 %812
    %v814 = vsel %vm560, %v808, -inf
    %815 = vmax.xlane.f32.xlu0 %v814
    %v816 = vpop.xlane.xlu0 %815
    %v817 = vsel %vm560, %v809, -inf
    %818 = vmax.xlane.f32.xlu0 %v817
    %v819 = vpop.xlane.xlu0 %818
    %v820 = vsel %vm560, %v810, -inf
    %821 = vmax.xlane.f32.xlu0 %v820
    %v822 = vpop.xlane.xlu0 %821
    %v823 = vsub.f32 %v807, %v813
    %v824 = vsub.f32 %v808, %v816
    %v825 = vsub.f32 %v809, %v819
    %v826 = vsub.f32 %v810, %v822
    %v827 = vmul.f32 %v823, 1.442695
    %v828 = vpow.pop %v827
    %v829 = vmul.f32 %v824, 1.442695
    %v830 = vpow.pop %v829
    %v831 = vmul.f32 %v825, 1.442695
    %v832 = vpow.pop %v831
    %v833 = vmul.f32 %v826, 1.442695
    %v834 = vpow.pop %v833
    %v835 = vsel %vm560, %v828, 0.0
    %836 = vadd.xlane.f32.xlu0 %v835
    %v837 = vpop.xlane.xlu0 %836
    %v838 = vsel %vm560, %v830, 0.0
    %839 = vadd.xlane.f32.xlu0 %v838
    %v840 = vpop.xlane.xlu0 %839
    %v841 = vsel %vm560, %v832, 0.0
    %842 = vadd.xlane.f32.xlu0 %v841
    %v843 = vpop.xlane.xlu0 %842
    %v844 = vsel %vm560, %v834, 0.0
    %845 = vadd.xlane.f32.xlu0 %v844
    %v846 = vpop.xlane.xlu0 %845
    %v847 = vpack.c.bf16 %v830, %v828
    %v848 = vpack.c.bf16 %v834, %v832
    %850 = vrot.lane.b32.xlu0 %v599, 96
    %v851 = vpop.permute.xlu0 %850
    %v854 = vsel %vm560, %v847, 0
    %856 = vmatprep.subr.bf16.mxu0 0
    %857 = vmatpush1.bf16.msra.mxu0 0
    %858 = vmatprep.subr.bf16.mxu0 0
    %859 = vmatpush1.bf16.msra.mxu0 0
    %860 = vmatprep.subr.bf16.mxu0 0
    %861 = vmatpush1.bf16.msra.mxu0 0
    %862 = vmatprep.subr.bf16.mxu0 0
    %863 = vmatpush1.bf16.msra.mxu0 0
    %864 = vmatprep.subr.bf16.mxu0 0
    %865 = vmatpush1.bf16.msra.mxu0 0
    %866 = vmatprep.subr.bf16.mxu0 0
    %867 = vmatpush1.bf16.msra.mxu0 0
    %868 = vmatprep.subr.bf16.mxu0 0
    %869 = vmatpush1.bf16.msra.mxu0 0
    %870 = vmatprep.subr.bf16.mxu0 0
    %871 = vmatpush1.bf16.msra.mxu0 %v851
    %872 = vmatprep.subr.bf16.mxu0 0
    %873 = vmatpush2.bf16.msra.mxu0 0
    %874 = vmatprep.subr.bf16.mxu0 0
    %875 = vmatpush2.bf16.msra.mxu0 0
    %876 = vmatprep.subr.bf16.mxu0 0
    %877 = vmatpush2.bf16.msra.mxu0 0
    %878 = vmatprep.subr.bf16.mxu0 0
    %879 = vmatpush2.bf16.msra.mxu0 0
    %880 = vmatprep.subr.bf16.mxu0 0
    %881 = vmatpush2.bf16.msra.mxu0 0
    %882 = vmatprep.subr.bf16.mxu0 0
    %883 = vmatpush2.bf16.msra.mxu0 0
    %884 = vmatprep.subr.bf16.mxu0 0
    %885 = vmatpush2.bf16.msra.mxu0 0
    %886 = vmatprep.subr.bf16.mxu0 0
    %887 = vmatpush2.bf16.msra.mxu0 0
    %888 = vmatprep.mubr.bf16.mxu0 0
    %889 = vmatmul.mubr.bf16.gmra.mxu0 %v854
    %v890 = vpop.f32.mrf.mxu0
    %v891 = vadd.f32 0.0, %v890
    %v892 = vpop.f32.mrf.mxu0
    %v893 = vpop.f32.mrf.mxu0
    %v894 = vadd.f32 0.0, %v893
    %v895 = vpop.f32.mrf.mxu0
    %896 = vdwg.mxu0
    %898 = vrot.lane.b32.xlu0 %v600, 96
    %v899 = vpop.permute.xlu0 %898
    %v902 = vsel %vm560, %v848, 0
    %904 = vmatprep.subr.bf16.mxu0 0
    %905 = vmatpush1.bf16.msra.mxu0 0
    %906 = vmatprep.subr.bf16.mxu0 0
    %907 = vmatpush1.bf16.msra.mxu0 0
    %908 = vmatprep.subr.bf16.mxu0 0
    %909 = vmatpush1.bf16.msra.mxu0 0
    %910 = vmatprep.subr.bf16.mxu0 0
    %911 = vmatpush1.bf16.msra.mxu0 0
    %912 = vmatprep.subr.bf16.mxu0 0
    %913 = vmatpush1.bf16.msra.mxu0 0
    %914 = vmatprep.subr.bf16.mxu0 0
    %915 = vmatpush1.bf16.msra.mxu0 0
    %916 = vmatprep.subr.bf16.mxu0 0
    %917 = vmatpush1.bf16.msra.mxu0 0
    %918 = vmatprep.subr.bf16.mxu0 0
    %919 = vmatpush1.bf16.msra.mxu0 %v899
    %920 = vmatprep.subr.bf16.mxu0 0
    %921 = vmatpush2.bf16.msra.mxu0 0
    %922 = vmatprep.subr.bf16.mxu0 0
    %923 = vmatpush2.bf16.msra.mxu0 0
    %924 = vmatprep.subr.bf16.mxu0 0
    %925 = vmatpush2.bf16.msra.mxu0 0
    %926 = vmatprep.subr.bf16.mxu0 0
    %927 = vmatpush2.bf16.msra.mxu0 0
    %928 = vmatprep.subr.bf16.mxu0 0
    %929 = vmatpush2.bf16.msra.mxu0 0
    %930 = vmatprep.subr.bf16.mxu0 0
    %931 = vmatpush2.bf16.msra.mxu0 0
    %932 = vmatprep.subr.bf16.mxu0 0
    %933 = vmatpush2.bf16.msra.mxu0 0
    %934 = vmatprep.subr.bf16.mxu0 0
    %935 = vmatpush2.bf16.msra.mxu0 0
    %936 = vmatprep.mubr.bf16.mxu0 0
    %937 = vmatmul.mubr.bf16.gmra.mxu0 %v902
    %v938 = vpop.f32.mrf.mxu0
    %v939 = vadd.f32 0.0, %v938
    %v940 = vpop.f32.mrf.mxu0
    %v941 = vpop.f32.mrf.mxu0
    %v942 = vadd.f32 0.0, %v941
    %v943 = vpop.f32.mrf.mxu0
    %944 = vdwg.mxu0
    %v945 = vrcp.pop %v837
    %v946 = vrcp.pop %v840
    %v947 = vrcp.pop %v843
    %v948 = vrcp.pop %v846
    %v949 = vmul.f32 %v891, %v945
    %v950 = vmul.f32 %v894, %v946
    %v951 = vmul.f32 %v939, %v947
    %v952 = vmul.f32 %v942, %v948
    %953 = vrot.lane.b32.xlu0 %v453, 64
    %v954 = vpop.permute.xlu0 %953
    %955 = vrot.lane.b32.xlu0 %v455, 64
    %v956 = vpop.permute.xlu0 %955
    %v958 = vsel %vm457, %v954, 0
    %v961 = vsel %vm457, %v956, 0
    %963 = vmatprep.subr.bf16.mxu0 0
    %964 = vmatpush1.bf16.xpose.msra.mxu0 0
    %965 = vmatprep.subr.bf16.mxu0 0
    %966 = vmatpush1.bf16.xpose.msra.mxu0 0
    %967 = vmatprep.subr.bf16.mxu0 0
    %968 = vmatpush1.bf16.xpose.msra.mxu0 0
    %969 = vmatprep.subr.bf16.mxu0 0
    %970 = vmatpush1.bf16.xpose.msra.mxu0 0
    %971 = vmatprep.subr.bf16.mxu0 0
    %972 = vmatpush1.bf16.xpose.msra.mxu0 0
    %973 = vmatprep.subr.bf16.mxu0 0
    %974 = vmatpush1.bf16.xpose.msra.mxu0 0
    %975 = vmatprep.subr.bf16.mxu0 0
    %976 = vmatpush1.bf16.xpose.msra.mxu0 0
    %977 = vmatprep.subr.bf16.mxu0 0
    %978 = vmatpush1.bf16.xpose.msra.mxu0 %v961
    %979 = vmatprep.subr.bf16.mxu0 0
    %980 = vmatpush2.bf16.xpose.msra.mxu0 0
    %981 = vmatprep.subr.bf16.mxu0 0
    %982 = vmatpush2.bf16.xpose.msra.mxu0 0
    %983 = vmatprep.subr.bf16.mxu0 0
    %984 = vmatpush2.bf16.xpose.msra.mxu0 0
    %985 = vmatprep.subr.bf16.mxu0 0
    %986 = vmatpush2.bf16.xpose.msra.mxu0 0
    %987 = vmatprep.subr.bf16.mxu0 0
    %988 = vmatpush2.bf16.xpose.msra.mxu0 0
    %989 = vmatprep.subr.bf16.mxu0 0
    %990 = vmatpush2.bf16.xpose.msra.mxu0 0
    %991 = vmatprep.subr.bf16.mxu0 0
    %992 = vmatpush2.bf16.xpose.msra.mxu0 0
    %993 = vmatprep.subr.bf16.mxu0 0
    %994 = vmatpush2.bf16.xpose.msra.mxu0 0
    %995 = vmatprep.mubr.bf16.mxu0 0
    %996 = vmatmul.mubr.bf16.gmra.mxu0 %v958
    %v997 = vpop.f32.mrf.mxu0
    %v998 = vadd.f32 0.0, %v997
    %v999 = vpop.f32.mrf.mxu0
    %v1000 = vpop.f32.mrf.mxu0
    %v1001 = vadd.f32 0.0, %v1000
    %v1002 = vpop.f32.mrf.mxu0
    %1003 = vdwg.mxu0
    %1004 = vrot.lane.b32.xlu0 %v454, 64
    %v1005 = vpop.permute.xlu0 %1004
    %1006 = vrot.lane.b32.xlu0 %v456, 64
    %v1007 = vpop.permute.xlu0 %1006
    %v1009 = vsel %vm457, %v1005, 0
    %v1012 = vsel %vm457, %v1007, 0
    %1014 = vmatprep.subr.bf16.mxu0 0
    %1015 = vmatpush1.bf16.xpose.msra.mxu0 0
    %1016 = vmatprep.subr.bf16.mxu0 0
    %1017 = vmatpush1.bf16.xpose.msra.mxu0 0
    %1018 = vmatprep.subr.bf16.mxu0 0
    %1019 = vmatpush1.bf16.xpose.msra.mxu0 0
    %1020 = vmatprep.subr.bf16.mxu0 0
    %1021 = vmatpush1.bf16.xpose.msra.mxu0 0
    %1022 = vmatprep.subr.bf16.mxu0 0
    %1023 = vmatpush1.bf16.xpose.msra.mxu0 0
    %1024 = vmatprep.subr.bf16.mxu0 0
    %1025 = vmatpush1.bf16.xpose.msra.mxu0 0
    %1026 = vmatprep.subr.bf16.mxu0 0
    %1027 = vmatpush1.bf16.xpose.msra.mxu0 0
    %1028 = vmatprep.subr.bf16.mxu0 0
    %1029 = vmatpush1.bf16.xpose.msra.mxu0 %v1012
    %1030 = vmatprep.subr.bf16.mxu0 0
    %1031 = vmatpush2.bf16.xpose.msra.mxu0 0
    %1032 = vmatprep.subr.bf16.mxu0 0
    %1033 = vmatpush2.bf16.xpose.msra.mxu0 0
    %1034 = vmatprep.subr.bf16.mxu0 0
    %1035 = vmatpush2.bf16.xpose.msra.mxu0 0
    %1036 = vmatprep.subr.bf16.mxu0 0
    %1037 = vmatpush2.bf16.xpose.msra.mxu0 0
    %1038 = vmatprep.subr.bf16.mxu0 0
    %1039 = vmatpush2.bf16.xpose.msra.mxu0 0
    %1040 = vmatprep.subr.bf16.mxu0 0
    %1041 = vmatpush2.bf16.xpose.msra.mxu0 0
    %1042 = vmatprep.subr.bf16.mxu0 0
    %1043 = vmatpush2.bf16.xpose.msra.mxu0 0
    %1044 = vmatprep.subr.bf16.mxu0 0
    %1045 = vmatpush2.bf16.xpose.msra.mxu0 0
    %1046 = vmatprep.mubr.bf16.mxu0 0
    %1047 = vmatmul.mubr.bf16.gmra.mxu0 %v1009
    %v1048 = vpop.f32.mrf.mxu0
    %v1049 = vadd.f32 0.0, %v1048
    %v1050 = vpop.f32.mrf.mxu0
    %v1051 = vpop.f32.mrf.mxu0
    %v1052 = vadd.f32 0.0, %v1051
    %v1053 = vpop.f32.mrf.mxu0
    %1054 = vdwg.mxu0
    %v1055 = vmul.f32 %v998, 0.088388346
    %v1056 = vmul.f32 %v1001, 0.088388346
    %v1057 = vmul.f32 %v1049, 0.088388346
    %v1058 = vmul.f32 %v1052, 0.088388346
    %v1059 = vsel %vm451, %v1055, -1e+30
    %v1060 = vsel %vm452, %v1056, -1e+30
    %v1061 = vsel %vm451, %v1057, -1e+30
    %v1062 = vsel %vm452, %v1058, -1e+30
    %v1063 = vsel %vm560, %v1059, -inf
    %1064 = vmax.xlane.f32.xlu0 %v1063
    %v1065 = vpop.xlane.xlu0 %1064
    %v1066 = vsel %vm560, %v1060, -inf
    %1067 = vmax.xlane.f32.xlu0 %v1066
    %v1068 = vpop.xlane.xlu0 %1067
    %v1069 = vsel %vm560, %v1061, -inf
    %1070 = vmax.xlane.f32.xlu0 %v1069
    %v1071 = vpop.xlane.xlu0 %1070
    %v1072 = vsel %vm560, %v1062, -inf
    %1073 = vmax.xlane.f32.xlu0 %v1072
    %v1074 = vpop.xlane.xlu0 %1073
    %v1075 = vsub.f32 %v1059, %v1065
    %v1076 = vsub.f32 %v1060, %v1068
    %v1077 = vsub.f32 %v1061, %v1071
    %v1078 = vsub.f32 %v1062, %v1074
    %v1079 = vmul.f32 %v1075, 1.442695
    %v1080 = vpow.pop %v1079
    %v1081 = vmul.f32 %v1076, 1.442695
    %v1082 = vpow.pop %v1081
    %v1083 = vmul.f32 %v1077, 1.442695
    %v1084 = vpow.pop %v1083
    %v1085 = vmul.f32 %v1078, 1.442695
    %v1086 = vpow.pop %v1085
    %v1087 = vsel %vm560, %v1080, 0.0
    %1088 = vadd.xlane.f32.xlu0 %v1087
    %v1089 = vpop.xlane.xlu0 %1088
    %v1090 = vsel %vm560, %v1082, 0.0
    %1091 = vadd.xlane.f32.xlu0 %v1090
    %v1092 = vpop.xlane.xlu0 %1091
    %v1093 = vsel %vm560, %v1084, 0.0
    %1094 = vadd.xlane.f32.xlu0 %v1093
    %v1095 = vpop.xlane.xlu0 %1094
    %v1096 = vsel %vm560, %v1086, 0.0
    %1097 = vadd.xlane.f32.xlu0 %v1096
    %v1098 = vpop.xlane.xlu0 %1097
    %v1099 = vpack.c.bf16 %v1082, %v1080
    %v1100 = vpack.c.bf16 %v1086, %v1084
    %1101 = vrot.lane.b32.xlu0 %v599, 64
    %v1102 = vpop.permute.xlu0 %1101
    %v1105 = vsel %vm560, %v1099, 0
    %1107 = vmatprep.subr.bf16.mxu0 0
    %1108 = vmatpush1.bf16.msra.mxu0 0
    %1109 = vmatprep.subr.bf16.mxu0 0
    %1110 = vmatpush1.bf16.msra.mxu0 0
    %1111 = vmatprep.subr.bf16.mxu0 0
    %1112 = vmatpush1.bf16.msra.mxu0 0
    %1113 = vmatprep.subr.bf16.mxu0 0
    %1114 = vmatpush1.bf16.msra.mxu0 0
    %1115 = vmatprep.subr.bf16.mxu0 0
    %1116 = vmatpush1.bf16.msra.mxu0 0
    %1117 = vmatprep.subr.bf16.mxu0 0
    %1118 = vmatpush1.bf16.msra.mxu0 0
    %1119 = vmatprep.subr.bf16.mxu0 0
    %1120 = vmatpush1.bf16.msra.mxu0 0
    %1121 = vmatprep.subr.bf16.mxu0 0
    %1122 = vmatpush1.bf16.msra.mxu0 %v1102
    %1123 = vmatprep.subr.bf16.mxu0 0
    %1124 = vmatpush2.bf16.msra.mxu0 0
    %1125 = vmatprep.subr.bf16.mxu0 0
    %1126 = vmatpush2.bf16.msra.mxu0 0
    %1127 = vmatprep.subr.bf16.mxu0 0
    %1128 = vmatpush2.bf16.msra.mxu0 0
    %1129 = vmatprep.subr.bf16.mxu0 0
    %1130 = vmatpush2.bf16.msra.mxu0 0
    %1131 = vmatprep.subr.bf16.mxu0 0
    %1132 = vmatpush2.bf16.msra.mxu0 0
    %1133 = vmatprep.subr.bf16.mxu0 0
    %1134 = vmatpush2.bf16.msra.mxu0 0
    %1135 = vmatprep.subr.bf16.mxu0 0
    %1136 = vmatpush2.bf16.msra.mxu0 0
    %1137 = vmatprep.subr.bf16.mxu0 0
    %1138 = vmatpush2.bf16.msra.mxu0 0
    %1139 = vmatprep.mubr.bf16.mxu0 0
    %1140 = vmatmul.mubr.bf16.gmra.mxu0 %v1105
    %v1141 = vpop.f32.mrf.mxu0
    %v1142 = vadd.f32 0.0, %v1141
    %v1143 = vpop.f32.mrf.mxu0
    %v1144 = vpop.f32.mrf.mxu0
    %v1145 = vadd.f32 0.0, %v1144
    %v1146 = vpop.f32.mrf.mxu0
    %1147 = vdwg.mxu0
    %1148 = vrot.lane.b32.xlu0 %v600, 64
    %v1149 = vpop.permute.xlu0 %1148
    %v1152 = vsel %vm560, %v1100, 0
    %1154 = vmatprep.subr.bf16.mxu0 0
    %1155 = vmatpush1.bf16.msra.mxu0 0
    %1156 = vmatprep.subr.bf16.mxu0 0
    %1157 = vmatpush1.bf16.msra.mxu0 0
    %1158 = vmatprep.subr.bf16.mxu0 0
    %1159 = vmatpush1.bf16.msra.mxu0 0
    %1160 = vmatprep.subr.bf16.mxu0 0
    %1161 = vmatpush1.bf16.msra.mxu0 0
    %1162 = vmatprep.subr.bf16.mxu0 0
    %1163 = vmatpush1.bf16.msra.mxu0 0
    %1164 = vmatprep.subr.bf16.mxu0 0
    %1165 = vmatpush1.bf16.msra.mxu0 0
    %1166 = vmatprep.subr.bf16.mxu0 0
    %1167 = vmatpush1.bf16.msra.mxu0 0
    %1168 = vmatprep.subr.bf16.mxu0 0
    %1169 = vmatpush1.bf16.msra.mxu0 %v1149
    %1170 = vmatprep.subr.bf16.mxu0 0
    %1171 = vmatpush2.bf16.msra.mxu0 0
    %1172 = vmatprep.subr.bf16.mxu0 0
    %1173 = vmatpush2.bf16.msra.mxu0 0
    %1174 = vmatprep.subr.bf16.mxu0 0
    %1175 = vmatpush2.bf16.msra.mxu0 0
    %1176 = vmatprep.subr.bf16.mxu0 0
    %1177 = vmatpush2.bf16.msra.mxu0 0
    %1178 = vmatprep.subr.bf16.mxu0 0
    %1179 = vmatpush2.bf16.msra.mxu0 0
    %1180 = vmatprep.subr.bf16.mxu0 0
    %1181 = vmatpush2.bf16.msra.mxu0 0
    %1182 = vmatprep.subr.bf16.mxu0 0
    %1183 = vmatpush2.bf16.msra.mxu0 0
    %1184 = vmatprep.subr.bf16.mxu0 0
    %1185 = vmatpush2.bf16.msra.mxu0 0
    %1186 = vmatprep.mubr.bf16.mxu0 0
    %1187 = vmatmul.mubr.bf16.gmra.mxu0 %v1152
    %v1188 = vpop.f32.mrf.mxu0
    %v1189 = vadd.f32 0.0, %v1188
    %v1190 = vpop.f32.mrf.mxu0
    %v1191 = vpop.f32.mrf.mxu0
    %v1192 = vadd.f32 0.0, %v1191
    %v1193 = vpop.f32.mrf.mxu0
    %1194 = vdwg.mxu0
    %v1195 = vrcp.pop %v1089
    %v1196 = vrcp.pop %v1092
    %v1197 = vrcp.pop %v1095
    %v1198 = vrcp.pop %v1098
    %v1199 = vmul.f32 %v1142, %v1195
    %v1200 = vmul.f32 %v1145, %v1196
    %v1201 = vmul.f32 %v1189, %v1197
    %v1202 = vmul.f32 %v1192, %v1198
    %1203 = vrot.lane.b32.xlu0 %v453, 32
    %v1204 = vpop.permute.xlu0 %1203
    %1205 = vrot.lane.b32.xlu0 %v455, 32
    %v1206 = vpop.permute.xlu0 %1205
    %v1208 = vsel %vm457, %v1204, 0
    %v1211 = vsel %vm457, %v1206, 0
    %1213 = vmatprep.subr.bf16.mxu0 0
    %1214 = vmatpush1.bf16.xpose.msra.mxu0 0
    %1215 = vmatprep.subr.bf16.mxu0 0
    %1216 = vmatpush1.bf16.xpose.msra.mxu0 0
    %1217 = vmatprep.subr.bf16.mxu0 0
    %1218 = vmatpush1.bf16.xpose.msra.mxu0 0
    %1219 = vmatprep.subr.bf16.mxu0 0
    %1220 = vmatpush1.bf16.xpose.msra.mxu0 0
    %1221 = vmatprep.subr.bf16.mxu0 0
    %1222 = vmatpush1.bf16.xpose.msra.mxu0 0
    %1223 = vmatprep.subr.bf16.mxu0 0
    %1224 = vmatpush1.bf16.xpose.msra.mxu0 0
    %1225 = vmatprep.subr.bf16.mxu0 0
    %1226 = vmatpush1.bf16.xpose.msra.mxu0 0
    %1227 = vmatprep.subr.bf16.mxu0 0
    %1228 = vmatpush1.bf16.xpose.msra.mxu0 %v1211
    %1229 = vmatprep.subr.bf16.mxu0 0
    %1230 = vmatpush2.bf16.xpose.msra.mxu0 0
    %1231 = vmatprep.subr.bf16.mxu0 0
    %1232 = vmatpush2.bf16.xpose.msra.mxu0 0
    %1233 = vmatprep.subr.bf16.mxu0 0
    %1234 = vmatpush2.bf16.xpose.msra.mxu0 0
    %1235 = vmatprep.subr.bf16.mxu0 0
    %1236 = vmatpush2.bf16.xpose.msra.mxu0 0
    %1237 = vmatprep.subr.bf16.mxu0 0
    %1238 = vmatpush2.bf16.xpose.msra.mxu0 0
    %1239 = vmatprep.subr.bf16.mxu0 0
    %1240 = vmatpush2.bf16.xpose.msra.mxu0 0
    %1241 = vmatprep.subr.bf16.mxu0 0
    %1242 = vmatpush2.bf16.xpose.msra.mxu0 0
    %1243 = vmatprep.subr.bf16.mxu0 0
    %1244 = vmatpush2.bf16.xpose.msra.mxu0 0
    %1245 = vmatprep.mubr.bf16.mxu0 0
    %1246 = vmatmul.mubr.bf16.gmra.mxu0 %v1208
    %v1247 = vpop.f32.mrf.mxu0
    %v1248 = vadd.f32 0.0, %v1247
    %v1249 = vpop.f32.mrf.mxu0
    %v1250 = vpop.f32.mrf.mxu0
    %v1251 = vadd.f32 0.0, %v1250
    %v1252 = vpop.f32.mrf.mxu0
    %1253 = vdwg.mxu0
    %1254 = vrot.lane.b32.xlu0 %v454, 32
    %v1255 = vpop.permute.xlu0 %1254
    %1256 = vrot.lane.b32.xlu0 %v456, 32
    %v1257 = vpop.permute.xlu0 %1256
    %v1259 = vsel %vm457, %v1255, 0
    %v1262 = vsel %vm457, %v1257, 0
    %1264 = vmatprep.subr.bf16.mxu0 0
    %1265 = vmatpush1.bf16.xpose.msra.mxu0 0
    %1266 = vmatprep.subr.bf16.mxu0 0
    %1267 = vmatpush1.bf16.xpose.msra.mxu0 0
    %1268 = vmatprep.subr.bf16.mxu0 0
    %1269 = vmatpush1.bf16.xpose.msra.mxu0 0
    %1270 = vmatprep.subr.bf16.mxu0 0
    %1271 = vmatpush1.bf16.xpose.msra.mxu0 0
    %1272 = vmatprep.subr.bf16.mxu0 0
    %1273 = vmatpush1.bf16.xpose.msra.mxu0 0
    %1274 = vmatprep.subr.bf16.mxu0 0
    %1275 = vmatpush1.bf16.xpose.msra.mxu0 0
    %1276 = vmatprep.subr.bf16.mxu0 0
    %1277 = vmatpush1.bf16.xpose.msra.mxu0 0
    %1278 = vmatprep.subr.bf16.mxu0 0
    %1279 = vmatpush1.bf16.xpose.msra.mxu0 %v1262
    %1280 = vmatprep.subr.bf16.mxu0 0
    %1281 = vmatpush2.bf16.xpose.msra.mxu0 0
    %1282 = vmatprep.subr.bf16.mxu0 0
    %1283 = vmatpush2.bf16.xpose.msra.mxu0 0
    %1284 = vmatprep.subr.bf16.mxu0 0
    %1285 = vmatpush2.bf16.xpose.msra.mxu0 0
    %1286 = vmatprep.subr.bf16.mxu0 0
    %1287 = vmatpush2.bf16.xpose.msra.mxu0 0
    %1288 = vmatprep.subr.bf16.mxu0 0
    %1289 = vmatpush2.bf16.xpose.msra.mxu0 0
    %1290 = vmatprep.subr.bf16.mxu0 0
    %1291 = vmatpush2.bf16.xpose.msra.mxu0 0
    %1292 = vmatprep.subr.bf16.mxu0 0
    %1293 = vmatpush2.bf16.xpose.msra.mxu0 0
    %1294 = vmatprep.subr.bf16.mxu0 0
    %1295 = vmatpush2.bf16.xpose.msra.mxu0 0
    %1296 = vmatprep.mubr.bf16.mxu0 0
    %1297 = vmatmul.mubr.bf16.gmra.mxu0 %v1259
    %v1298 = vpop.f32.mrf.mxu0
    %v1299 = vadd.f32 0.0, %v1298
    %v1300 = vpop.f32.mrf.mxu0
    %v1301 = vpop.f32.mrf.mxu0
    %v1302 = vadd.f32 0.0, %v1301
    %v1303 = vpop.f32.mrf.mxu0
    %1304 = vdwg.mxu0
    %v1305 = vmul.f32 %v1248, 0.088388346
    %v1306 = vmul.f32 %v1251, 0.088388346
    %v1307 = vmul.f32 %v1299, 0.088388346
    %v1308 = vmul.f32 %v1302, 0.088388346
    %v1309 = vsel %vm451, %v1305, -1e+30
    %v1310 = vsel %vm452, %v1306, -1e+30
    %v1311 = vsel %vm451, %v1307, -1e+30
    %v1312 = vsel %vm452, %v1308, -1e+30
    %v1313 = vsel %vm560, %v1309, -inf
    %1314 = vmax.xlane.f32.xlu0 %v1313
    %v1315 = vpop.xlane.xlu0 %1314
    %v1316 = vsel %vm560, %v1310, -inf
    %1317 = vmax.xlane.f32.xlu0 %v1316
    %v1318 = vpop.xlane.xlu0 %1317
    %v1319 = vsel %vm560, %v1311, -inf
    %1320 = vmax.xlane.f32.xlu0 %v1319
    %v1321 = vpop.xlane.xlu0 %1320
    %v1322 = vsel %vm560, %v1312, -inf
    %1323 = vmax.xlane.f32.xlu0 %v1322
    %v1324 = vpop.xlane.xlu0 %1323
    %v1325 = vsub.f32 %v1309, %v1315
    %v1326 = vsub.f32 %v1310, %v1318
    %v1327 = vsub.f32 %v1311, %v1321
    %v1328 = vsub.f32 %v1312, %v1324
    %v1329 = vmul.f32 %v1325, 1.442695
    %v1330 = vpow.pop %v1329
    %v1331 = vmul.f32 %v1326, 1.442695
    %v1332 = vpow.pop %v1331
    %v1333 = vmul.f32 %v1327, 1.442695
    %v1334 = vpow.pop %v1333
    %v1335 = vmul.f32 %v1328, 1.442695
    %v1336 = vpow.pop %v1335
    %v1337 = vsel %vm560, %v1330, 0.0
    %1338 = vadd.xlane.f32.xlu0 %v1337
    %v1339 = vpop.xlane.xlu0 %1338
    %v1340 = vsel %vm560, %v1332, 0.0
    %1341 = vadd.xlane.f32.xlu0 %v1340
    %v1342 = vpop.xlane.xlu0 %1341
    %v1343 = vsel %vm560, %v1334, 0.0
    %1344 = vadd.xlane.f32.xlu0 %v1343
    %v1345 = vpop.xlane.xlu0 %1344
    %v1346 = vsel %vm560, %v1336, 0.0
    %1347 = vadd.xlane.f32.xlu0 %v1346
    %v1348 = vpop.xlane.xlu0 %1347
    %v1349 = vpack.c.bf16 %v1332, %v1330
    %v1350 = vpack.c.bf16 %v1336, %v1334
    %1351 = vrot.lane.b32.xlu0 %v599, 32
    %v1352 = vpop.permute.xlu0 %1351
    %v1355 = vsel %vm560, %v1349, 0
    %1357 = vmatprep.subr.bf16.mxu0 0
    %1358 = vmatpush1.bf16.msra.mxu0 0
    %1359 = vmatprep.subr.bf16.mxu0 0
    %1360 = vmatpush1.bf16.msra.mxu0 0
    %1361 = vmatprep.subr.bf16.mxu0 0
    %1362 = vmatpush1.bf16.msra.mxu0 0
    %1363 = vmatprep.subr.bf16.mxu0 0
    %1364 = vmatpush1.bf16.msra.mxu0 0
    %1365 = vmatprep.subr.bf16.mxu0 0
    %1366 = vmatpush1.bf16.msra.mxu0 0
    %1367 = vmatprep.subr.bf16.mxu0 0
    %1368 = vmatpush1.bf16.msra.mxu0 0
    %1369 = vmatprep.subr.bf16.mxu0 0
    %1370 = vmatpush1.bf16.msra.mxu0 0
    %1371 = vmatprep.subr.bf16.mxu0 0
    %1372 = vmatpush1.bf16.msra.mxu0 %v1352
    %1373 = vmatprep.subr.bf16.mxu0 0
    %1374 = vmatpush2.bf16.msra.mxu0 0
    %1375 = vmatprep.subr.bf16.mxu0 0
    %1376 = vmatpush2.bf16.msra.mxu0 0
    %1377 = vmatprep.subr.bf16.mxu0 0
    %1378 = vmatpush2.bf16.msra.mxu0 0
    %1379 = vmatprep.subr.bf16.mxu0 0
    %1380 = vmatpush2.bf16.msra.mxu0 0
    %1381 = vmatprep.subr.bf16.mxu0 0
    %1382 = vmatpush2.bf16.msra.mxu0 0
    %1383 = vmatprep.subr.bf16.mxu0 0
    %1384 = vmatpush2.bf16.msra.mxu0 0
    %1385 = vmatprep.subr.bf16.mxu0 0
    %1386 = vmatpush2.bf16.msra.mxu0 0
    %1387 = vmatprep.subr.bf16.mxu0 0
    %1388 = vmatpush2.bf16.msra.mxu0 0
    %1389 = vmatprep.mubr.bf16.mxu0 0
    %1390 = vmatmul.mubr.bf16.gmra.mxu0 %v1355
    %v1391 = vpop.f32.mrf.mxu0
    %v1392 = vadd.f32 0.0, %v1391
    %v1393 = vpop.f32.mrf.mxu0
    %v1394 = vpop.f32.mrf.mxu0
    %v1395 = vadd.f32 0.0, %v1394
    %v1396 = vpop.f32.mrf.mxu0
    %1397 = vdwg.mxu0
    %1398 = vrot.lane.b32.xlu0 %v600, 32
    %v1399 = vpop.permute.xlu0 %1398
    %v1402 = vsel %vm560, %v1350, 0
    %1404 = vmatprep.subr.bf16.mxu0 0
    %1405 = vmatpush1.bf16.msra.mxu0 0
    %1406 = vmatprep.subr.bf16.mxu0 0
    %1407 = vmatpush1.bf16.msra.mxu0 0
    %1408 = vmatprep.subr.bf16.mxu0 0
    %1409 = vmatpush1.bf16.msra.mxu0 0
    %1410 = vmatprep.subr.bf16.mxu0 0
    %1411 = vmatpush1.bf16.msra.mxu0 0
    %1412 = vmatprep.subr.bf16.mxu0 0
    %1413 = vmatpush1.bf16.msra.mxu0 0
    %1414 = vmatprep.subr.bf16.mxu0 0
    %1415 = vmatpush1.bf16.msra.mxu0 0
    %1416 = vmatprep.subr.bf16.mxu0 0
    %1417 = vmatpush1.bf16.msra.mxu0 0
    %1418 = vmatprep.subr.bf16.mxu0 0
    %1419 = vmatpush1.bf16.msra.mxu0 %v1399
    %1420 = vmatprep.subr.bf16.mxu0 0
    %1421 = vmatpush2.bf16.msra.mxu0 0
    %1422 = vmatprep.subr.bf16.mxu0 0
    %1423 = vmatpush2.bf16.msra.mxu0 0
    %1424 = vmatprep.subr.bf16.mxu0 0
    %1425 = vmatpush2.bf16.msra.mxu0 0
    %1426 = vmatprep.subr.bf16.mxu0 0
    %1427 = vmatpush2.bf16.msra.mxu0 0
    %1428 = vmatprep.subr.bf16.mxu0 0
    %1429 = vmatpush2.bf16.msra.mxu0 0
    %1430 = vmatprep.subr.bf16.mxu0 0
    %1431 = vmatpush2.bf16.msra.mxu0 0
    %1432 = vmatprep.subr.bf16.mxu0 0
    %1433 = vmatpush2.bf16.msra.mxu0 0
    %1434 = vmatprep.subr.bf16.mxu0 0
    %1435 = vmatpush2.bf16.msra.mxu0 0
    %1436 = vmatprep.mubr.bf16.mxu0 0
    %1437 = vmatmul.mubr.bf16.gmra.mxu0 %v1402
    %v1438 = vpop.f32.mrf.mxu0
    %v1439 = vadd.f32 0.0, %v1438
    %v1440 = vpop.f32.mrf.mxu0
    %v1441 = vpop.f32.mrf.mxu0
    %v1442 = vadd.f32 0.0, %v1441
    %v1443 = vpop.f32.mrf.mxu0
    %1444 = vdwg.mxu0
    %v1445 = vrcp.pop %v1339
    %v1446 = vrcp.pop %v1342
    %v1447 = vrcp.pop %v1345
    %v1448 = vrcp.pop %v1348
    %v1449 = vmul.f32 %v1392, %v1445
    %v1450 = vmul.f32 %v1395, %v1446
    %v1451 = vmul.f32 %v1439, %v1447
    %v1452 = vmul.f32 %v1442, %v1448
    %1457 = vrot.lane.b32.xlu0 %v949, 32
    %v1458 = vpop.permute.xlu0 %1457
    %1459 = vrot.lane.b32.xlu0 %v950, 32
    %v1460 = vpop.permute.xlu0 %1459
    %1461 = vrot.lane.b32.xlu0 %v951, 32
    %v1462 = vpop.permute.xlu0 %1461
    %1463 = vrot.lane.b32.xlu0 %v952, 32
    %v1464 = vpop.permute.xlu0 %1463
    %1473 = vrot.lane.b32.xlu0 %v1199, 64
    %v1474 = vpop.permute.xlu0 %1473
    %1475 = vrot.lane.b32.xlu0 %v1200, 64
    %v1476 = vpop.permute.xlu0 %1475
    %1477 = vrot.lane.b32.xlu0 %v1201, 64
    %v1478 = vpop.permute.xlu0 %1477
    %1479 = vrot.lane.b32.xlu0 %v1202, 64
    %v1480 = vpop.permute.xlu0 %1479
    %1489 = vrot.lane.b32.xlu0 %v1449, 96
    %v1490 = vpop.permute.xlu0 %1489
    %1491 = vrot.lane.b32.xlu0 %v1450, 96
    %v1492 = vpop.permute.xlu0 %1491
    %1493 = vrot.lane.b32.xlu0 %v1451, 96
    %v1494 = vpop.permute.xlu0 %1493
    %1495 = vrot.lane.b32.xlu0 %v1452, 96
    %v1496 = vpop.permute.xlu0 %1495
    %v1501 = vsel %vm457, %v693, %v1458
    %v1502 = vsel %vm457, %v694, %v1460
    %v1503 = vsel %vm457, %v695, %v1462
    %v1504 = vsel %vm457, %v696, %v1464
    %vm1505 = vcmask 523264
    %v1506 = vsel %vm1505, %v1501, %v1474
    %v1507 = vsel %vm1505, %v1502, %v1476
    %v1508 = vsel %vm1505, %v1503, %v1478
    %v1509 = vsel %vm1505, %v1504, %v1480
    %vm1510 = vcmask 785408
    %v1511 = vsel %vm1510, %v1506, %v1490
    %v1512 = vsel %vm1510, %v1507, %v1492
    %v1513 = vsel %vm1510, %v1508, %v1494
    %v1514 = vsel %vm1510, %v1509, %v1496
    %v1515 = vpack.c.bf16 %v1512, %v1511
    %v1516 = vpack.c.bf16 %v1514, %v1513
    %v1517 = vld [vmem:[#allocation7] sm:$0xf]
    %v1518 = vld [vmem:[#allocation7 + $0x4] sm:$0xf]
    %v1519 = vld [vmem:[#allocation7 + $0x8] sm:$0xf]
    %v1520 = vld [vmem:[#allocation7 + $0xc] sm:$0xf]
    %v1521 = vld [vmem:[#allocation7 + $0x10] sm:$0xf]
    %v1522 = vld [vmem:[#allocation7 + $0x14] sm:$0xf]
    %v1523 = vld [vmem:[#allocation7 + $0x18] sm:$0xf]
    %v1524 = vld [vmem:[#allocation7 + $0x1c] sm:$0xf]
    %v1525 = vld [vmem:[#allocation7 + $0x20] sm:$0xf]
    %v1526 = vld [vmem:[#allocation7 + $0x24] sm:$0xf]
    %v1527 = vld [vmem:[#allocation7 + $0x28] sm:$0xf]
    %v1528 = vld [vmem:[#allocation7 + $0x2c] sm:$0xf]
    %v1529 = vld [vmem:[#allocation7 + $0x30] sm:$0xf]
    %v1530 = vld [vmem:[#allocation7 + $0x34] sm:$0xf]
    %v1531 = vld [vmem:[#allocation7 + $0x38] sm:$0xf]
    %v1532 = vld [vmem:[#allocation7 + $0x3c] sm:$0xf]
    %v1533 = vld [vmem:[%s5] sm:$0x1]
    %v1535 = vlaneseq
    %v1536 = vshrl.u32 %v1535, 7
    %v1537 = vsub.s32 0, %v1536
    %v1538 = vrot.slane %v1533, %v1537
    %v1556 = vunpack.c.l.b16 %v1517
    %v1557 = vunpack.c.l.b16 %v1518
    %v1558 = vunpack.c.l.b16 %v1519
    %v1559 = vunpack.c.l.b16 %v1520
    %v1560 = vunpack.c.l.b16 %v1521
    %v1561 = vunpack.c.l.b16 %v1522
    %v1562 = vunpack.c.l.b16 %v1523
    %v1563 = vunpack.c.l.b16 %v1524
    %v1564 = vunpack.c.l.b16 %v1525
    %v1565 = vunpack.c.l.b16 %v1526
    %v1566 = vunpack.c.l.b16 %v1527
    %v1567 = vunpack.c.l.b16 %v1528
    %v1568 = vunpack.c.l.b16 %v1529
    %v1569 = vunpack.c.l.b16 %v1530
    %v1570 = vunpack.c.l.b16 %v1531
    %v1571 = vunpack.c.l.b16 %v1532
    %v1572 = vpack.c.b16 %v1557, %v1556
    %v1573 = vpack.c.b16 %v1559, %v1558
    %v1574 = vpack.c.b16 %v1561, %v1560
    %v1575 = vpack.c.b16 %v1563, %v1562
    %v1576 = vpack.c.b16 %v1565, %v1564
    %v1577 = vpack.c.b16 %v1567, %v1566
    %v1578 = vpack.c.b16 %v1569, %v1568
    %v1579 = vpack.c.b16 %v1571, %v1570
    %1588 = vmatprep.subr.bf16.mxu0 0
    %1589 = vmatpush1.bf16.msra.mxu0 %v1579
    %1590 = vmatprep.subr.bf16.mxu0 0
    %1591 = vmatpush1.bf16.msra.mxu0 %v1578
    %1592 = vmatprep.subr.bf16.mxu0 0
    %1593 = vmatpush1.bf16.msra.mxu0 %v1577
    %1594 = vmatprep.subr.bf16.mxu0 0
    %1595 = vmatpush1.bf16.msra.mxu0 %v1576
    %1596 = vmatprep.subr.bf16.mxu0 0
    %1597 = vmatpush1.bf16.msra.mxu0 %v1575
    %1598 = vmatprep.subr.bf16.mxu0 0
    %1599 = vmatpush1.bf16.msra.mxu0 %v1574
    %1600 = vmatprep.subr.bf16.mxu0 0
    %1601 = vmatpush1.bf16.msra.mxu0 %v1573
    %1602 = vmatprep.subr.bf16.mxu0 0
    %1603 = vmatpush1.bf16.msra.mxu0 %v1572
    %1604 = vmatprep.subr.bf16.mxu0 0
    %1605 = vmatpush2.bf16.msra.mxu0 0
    %1606 = vmatprep.subr.bf16.mxu0 0
    %1607 = vmatpush2.bf16.msra.mxu0 0
    %1608 = vmatprep.subr.bf16.mxu0 0
    %1609 = vmatpush2.bf16.msra.mxu0 0
    %1610 = vmatprep.subr.bf16.mxu0 0
    %1611 = vmatpush2.bf16.msra.mxu0 0
    %1612 = vmatprep.subr.bf16.mxu0 0
    %1613 = vmatpush2.bf16.msra.mxu0 0
    %1614 = vmatprep.subr.bf16.mxu0 0
    %1615 = vmatpush2.bf16.msra.mxu0 0
    %1616 = vmatprep.subr.bf16.mxu0 0
    %1617 = vmatpush2.bf16.msra.mxu0 0
    %1618 = vmatprep.subr.bf16.mxu0 0
    %1619 = vmatpush2.bf16.msra.mxu0 0
    %1620 = vmatprep.mubr.bf16.mxu0 0
    %1621 = vmatmul.mubr.bf16.gmra.mxu0 %v1515
    %v1622 = vpop.f32.mrf.mxu0
    %v1623 = vadd.f32 %v1538, %v1622
    %v1624 = vpop.f32.mrf.mxu0
    %v1625 = vpop.f32.mrf.mxu0
    %v1626 = vadd.f32 %v1538, %v1625
    %v1627 = vpop.f32.mrf.mxu0
    %1628 = vmatprep.mubr.bf16.mxu0 0
    %1629 = vmatmul.mubr.bf16.gmra.mxu0 %v1516
    %v1630 = vpop.f32.mrf.mxu0
    %v1631 = vadd.f32 %v1538, %v1630
    %v1632 = vpop.f32.mrf.mxu0
    %v1633 = vpop.f32.mrf.mxu0
    %v1634 = vadd.f32 %v1538, %v1633
    %v1635 = vpop.f32.mrf.mxu0
    %1636 = vdwg.mxu0
    %v1637 = vadd.f32 %v111, %v1623
    %v1638 = vadd.f32 %v112, %v1626
    %v1639 = vadd.f32 %v113, %v1631
    %v1640 = vadd.f32 %v114, %v1634
    %v1641 = vld [vmem:[%s6] sm:$0x1]
    %v1642 = vld [vmem:[%s7] sm:$0x1]
    %1643 = vadd.xlane.f32.xlu0 %v1637
    %v1644 = vpop.xlane.xlu0 %1643
    %1645 = vadd.xlane.f32.xlu0 %v1638
    %v1646 = vpop.xlane.xlu0 %1645
    %1647 = vadd.xlane.f32.xlu0 %v1639
    %v1648 = vpop.xlane.xlu0 %1647
    %1649 = vadd.xlane.f32.xlu0 %v1640
    %v1650 = vpop.xlane.xlu0 %1649
    %v1651 = vmul.f32 %v1644, %v125
    %v1652 = vmul.f32 %v1646, %v125
    %v1653 = vmul.f32 %v1648, %v125
    %v1654 = vmul.f32 %v1650, %v125
    %v1655 = vsub.f32 %v1637, %v1651
    %v1656 = vsub.f32 %v1638, %v1652
    %v1657 = vsub.f32 %v1639, %v1653
    %v1658 = vsub.f32 %v1640, %v1654
    %v1659 = vmul.f32 %v1655, %v1655
    %v1660 = vmul.f32 %v1656, %v1656
    %v1661 = vmul.f32 %v1657, %v1657
    %v1662 = vmul.f32 %v1658, %v1658
    %1663 = vadd.xlane.f32.xlu0 %v1659
    %v1664 = vpop.xlane.xlu0 %1663
    %1665 = vadd.xlane.f32.xlu0 %v1660
    %v1666 = vpop.xlane.xlu0 %1665
    %1667 = vadd.xlane.f32.xlu0 %v1661
    %v1668 = vpop.xlane.xlu0 %1667
    %1669 = vadd.xlane.f32.xlu0 %v1662
    %v1670 = vpop.xlane.xlu0 %1669
    %v1671 = vmul.f32 %v1664, %v125
    %v1672 = vmul.f32 %v1666, %v125
    %v1673 = vmul.f32 %v1668, %v125
    %v1674 = vmul.f32 %v1670, %v125
    %v1675 = vadd.f32 %v1671, 1e-05
    %v1676 = vadd.f32 %v1672, 1e-05
    %v1677 = vadd.f32 %v1673, 1e-05
    %v1678 = vadd.f32 %v1674, 1e-05
    %v1679 = vrsqrt.pop %v1675
    %v1680 = vrsqrt.pop %v1676
    %v1681 = vrsqrt.pop %v1677
    %v1682 = vrsqrt.pop %v1678
    %v1683 = vmul.f32 %v1655, %v1679
    %v1684 = vmul.f32 %v1656, %v1680
    %v1685 = vmul.f32 %v1657, %v1681
    %v1686 = vmul.f32 %v1658, %v1682
    %v1688 = vlaneseq
    %v1689 = vshrl.u32 %v1688, 7
    %v1690 = vsub.s32 0, %v1689
    %v1691 = vrot.slane %v1641, %v1690
    %v1693 = vmul.f32 %v1683, %v1691
    %v1694 = vmul.f32 %v1684, %v1691
    %v1695 = vmul.f32 %v1685, %v1691
    %v1696 = vmul.f32 %v1686, %v1691
    %v1698 = vlaneseq
    %v1699 = vshrl.u32 %v1698, 7
    %v1700 = vsub.s32 0, %v1699
    %v1701 = vrot.slane %v1642, %v1700
    %v1703 = vadd.f32 %v1693, %v1701
    %v1704 = vadd.f32 %v1694, %v1701
    %v1705 = vadd.f32 %v1695, %v1701
    %v1706 = vadd.f32 %v1696, %v1701
    %v1707 = vpack.c.bf16 %v1704, %v1703
    %v1708 = vpack.c.bf16 %v1706, %v1705
    %v1709 = vld [vmem:[#allocation8] sm:$0xff]
    %v1710 = vld [vmem:[#allocation8 + $0x8] sm:$0xff]
    %v1711 = vld [vmem:[#allocation8 + $0x10] sm:$0xff]
    %v1712 = vld [vmem:[#allocation8 + $0x18] sm:$0xff]
    %v1713 = vld [vmem:[#allocation8 + $0x20] sm:$0xff]
    %v1714 = vld [vmem:[#allocation8 + $0x28] sm:$0xff]
    %v1715 = vld [vmem:[#allocation8 + $0x30] sm:$0xff]
    %v1716 = vld [vmem:[#allocation8 + $0x38] sm:$0xff]
    %v1717 = vld [vmem:[#allocation8 + $0x40] sm:$0xff]
    %v1718 = vld [vmem:[#allocation8 + $0x48] sm:$0xff]
    %v1719 = vld [vmem:[#allocation8 + $0x50] sm:$0xff]
    %v1720 = vld [vmem:[#allocation8 + $0x58] sm:$0xff]
    %v1721 = vld [vmem:[#allocation8 + $0x60] sm:$0xff]
    %v1722 = vld [vmem:[#allocation8 + $0x68] sm:$0xff]
    %v1723 = vld [vmem:[#allocation8 + $0x70] sm:$0xff]
    %v1724 = vld [vmem:[#allocation8 + $0x78] sm:$0xff]
    %v1725 = vld [vmem:[#allocation8 + $0x80] sm:$0xff]
    %v1726 = vld [vmem:[#allocation8 + $0x88] sm:$0xff]
    %v1727 = vld [vmem:[#allocation8 + $0x90] sm:$0xff]
    %v1728 = vld [vmem:[#allocation8 + $0x98] sm:$0xff]
    %v1729 = vld [vmem:[#allocation8 + $0xa0] sm:$0xff]
    %v1730 = vld [vmem:[#allocation8 + $0xa8] sm:$0xff]
    %v1731 = vld [vmem:[#allocation8 + $0xb0] sm:$0xff]
    %v1732 = vld [vmem:[#allocation8 + $0xb8] sm:$0xff]
    %v1733 = vld [vmem:[#allocation8 + $0xc0] sm:$0xff]
    %v1734 = vld [vmem:[#allocation8 + $0xc8] sm:$0xff]
    %v1735 = vld [vmem:[#allocation8 + $0xd0] sm:$0xff]
    %v1736 = vld [vmem:[#allocation8 + $0xd8] sm:$0xff]
    %v1737 = vld [vmem:[#allocation8 + $0xe0] sm:$0xff]
    %v1738 = vld [vmem:[#allocation8 + $0xe8] sm:$0xff]
    %v1739 = vld [vmem:[#allocation8 + $0xf0] sm:$0xff]
    %v1740 = vld [vmem:[#allocation8 + $0xf8] sm:$0xff]
    %v1741 = vld [vmem:[%s9] sm:$0xf]
    %v1743 = vlaneseq
    %v1744 = vshrl.u32 %v1743, 7
    %v1745 = vsub.s32 0, %v1744
    %v1746 = vrot.slane %v1741, %v1745
    %v1747 = vlaneseq
    %v1748 = vshrl.u32 %v1747, 7
    %v1749 = vsub.s32 1, %v1748
    %v1750 = vrot.slane %v1741, %v1749
    %v1751 = vlaneseq
    %v1752 = vshrl.u32 %v1751, 7
    %v1753 = vsub.s32 2, %v1752
    %v1754 = vrot.slane %v1741, %v1753
    %v1755 = vlaneseq
    %v1756 = vshrl.u32 %v1755, 7
    %v1757 = vsub.s32 3, %v1756
    %v1758 = vrot.slane %v1741, %v1757
    %v1795 = vunpack.c.l.b16 %v1709
    %v1796 = vunpack.c.h.b16 %v1709
    %v1797 = vunpack.c.l.b16 %v1710
    %v1798 = vunpack.c.h.b16 %v1710
    %v1799 = vunpack.c.l.b16 %v1711
    %v1800 = vunpack.c.h.b16 %v1711
    %v1801 = vunpack.c.l.b16 %v1712
    %v1802 = vunpack.c.h.b16 %v1712
    %v1803 = vunpack.c.l.b16 %v1713
    %v1804 = vunpack.c.h.b16 %v1713
    %v1805 = vunpack.c.l.b16 %v1714
    %v1806 = vunpack.c.h.b16 %v1714
    %v1807 = vunpack.c.l.b16 %v1715
    %v1808 = vunpack.c.h.b16 %v1715
    %v1809 = vunpack.c.l.b16 %v1716
    %v1810 = vunpack.c.h.b16 %v1716
    %v1811 = vunpack.c.l.b16 %v1717
    %v1812 = vunpack.c.h.b16 %v1717
    %v1813 = vunpack.c.l.b16 %v1718
    %v1814 = vunpack.c.h.b16 %v1718
    %v1815 = vunpack.c.l.b16 %v1719
    %v1816 = vunpack.c.h.b16 %v1719
    %v1817 = vunpack.c.l.b16 %v1720
    %v1818 = vunpack.c.h.b16 %v1720
    %v1819 = vunpack.c.l.b16 %v1721
    %v1820 = vunpack.c.h.b16 %v1721
    %v1821 = vunpack.c.l.b16 %v1722
    %v1822 = vunpack.c.h.b16 %v1722
    %v1823 = vunpack.c.l.b16 %v1723
    %v1824 = vunpack.c.h.b16 %v1723
    %v1825 = vunpack.c.l.b16 %v1724
    %v1826 = vunpack.c.h.b16 %v1724
    %v1827 = vunpack.c.l.b16 %v1725
    %v1828 = vunpack.c.h.b16 %v1725
    %v1829 = vunpack.c.l.b16 %v1726
    %v1830 = vunpack.c.h.b16 %v1726
    %v1831 = vunpack.c.l.b16 %v1727
    %v1832 = vunpack.c.h.b16 %v1727
    %v1833 = vunpack.c.l.b16 %v1728
    %v1834 = vunpack.c.h.b16 %v1728
    %v1835 = vunpack.c.l.b16 %v1729
    %v1836 = vunpack.c.h.b16 %v1729
    %v1837 = vunpack.c.l.b16 %v1730
    %v1838 = vunpack.c.h.b16 %v1730
    %v1839 = vunpack.c.l.b16 %v1731
    %v1840 = vunpack.c.h.b16 %v1731
    %v1841 = vunpack.c.l.b16 %v1732
    %v1842 = vunpack.c.h.b16 %v1732
    %v1843 = vunpack.c.l.b16 %v1733
    %v1844 = vunpack.c.h.b16 %v1733
    %v1845 = vunpack.c.l.b16 %v1734
    %v1846 = vunpack.c.h.b16 %v1734
    %v1847 = vunpack.c.l.b16 %v1735
    %v1848 = vunpack.c.h.b16 %v1735
    %v1849 = vunpack.c.l.b16 %v1736
    %v1850 = vunpack.c.h.b16 %v1736
    %v1851 = vunpack.c.l.b16 %v1737
    %v1852 = vunpack.c.h.b16 %v1737
    %v1853 = vunpack.c.l.b16 %v1738
    %v1854 = vunpack.c.h.b16 %v1738
    %v1855 = vunpack.c.l.b16 %v1739
    %v1856 = vunpack.c.h.b16 %v1739
    %v1857 = vunpack.c.l.b16 %v1740
    %v1858 = vunpack.c.h.b16 %v1740
    %v1859 = vpack.c.b16 %v1799, %v1795
    %v1860 = vpack.c.b16 %v1800, %v1796
    %v1861 = vpack.c.b16 %v1801, %v1797
    %v1862 = vpack.c.b16 %v1802, %v1798
    %v1863 = vpack.c.b16 %v1807, %v1803
    %v1864 = vpack.c.b16 %v1808, %v1804
    %v1865 = vpack.c.b16 %v1809, %v1805
    %v1866 = vpack.c.b16 %v1810, %v1806
    %v1867 = vpack.c.b16 %v1815, %v1811
    %v1868 = vpack.c.b16 %v1816, %v1812
    %v1869 = vpack.c.b16 %v1817, %v1813
    %v1870 = vpack.c.b16 %v1818, %v1814
    %v1871 = vpack.c.b16 %v1823, %v1819
    %v1872 = vpack.c.b16 %v1824, %v1820
    %v1873 = vpack.c.b16 %v1825, %v1821
    %v1874 = vpack.c.b16 %v1826, %v1822
    %v1875 = vpack.c.b16 %v1831, %v1827
    %v1876 = vpack.c.b16 %v1832, %v1828
    %v1877 = vpack.c.b16 %v1833, %v1829
    %v1878 = vpack.c.b16 %v1834, %v1830
    %v1879 = vpack.c.b16 %v1839, %v1835
    %v1880 = vpack.c.b16 %v1840, %v1836
    %v1881 = vpack.c.b16 %v1841, %v1837
    %v1882 = vpack.c.b16 %v1842, %v1838
    %v1883 = vpack.c.b16 %v1847, %v1843
    %v1884 = vpack.c.b16 %v1848, %v1844
    %v1885 = vpack.c.b16 %v1849, %v1845
    %v1886 = vpack.c.b16 %v1850, %v1846
    %v1887 = vpack.c.b16 %v1855, %v1851
    %v1888 = vpack.c.b16 %v1856, %v1852
    %v1889 = vpack.c.b16 %v1857, %v1853
    %v1890 = vpack.c.b16 %v1858, %v1854
    %1923 = vmatprep.subr.bf16.mxu0 %v1888
    %1924 = vmatpush1.bf16.msra.mxu0 %v1887
    %1925 = vmatprep.subr.bf16.mxu0 %v1884
    %1926 = vmatpush1.bf16.msra.mxu0 %v1883
    %1927 = vmatprep.subr.bf16.mxu0 %v1880
    %1928 = vmatpush1.bf16.msra.mxu0 %v1879
    %1929 = vmatprep.subr.bf16.mxu0 %v1876
    %1930 = vmatpush1.bf16.msra.mxu0 %v1875
    %1931 = vmatprep.subr.bf16.mxu0 %v1872
    %1932 = vmatpush1.bf16.msra.mxu0 %v1871
    %1933 = vmatprep.subr.bf16.mxu0 %v1868
    %1934 = vmatpush1.bf16.msra.mxu0 %v1867
    %1935 = vmatprep.subr.bf16.mxu0 %v1864
    %1936 = vmatpush1.bf16.msra.mxu0 %v1863
    %1937 = vmatprep.subr.bf16.mxu0 %v1860
    %1938 = vmatpush1.bf16.msra.mxu0 %v1859
    %1939 = vmatprep.subr.bf16.mxu0 0
    %1940 = vmatpush2.bf16.msra.mxu0 0
    %1941 = vmatprep.subr.bf16.mxu0 0
    %1942 = vmatpush2.bf16.msra.mxu0 0
    %1943 = vmatprep.subr.bf16.mxu0 0
    %1944 = vmatpush2.bf16.msra.mxu0 0
    %1945 = vmatprep.subr.bf16.mxu0 0
    %1946 = vmatpush2.bf16.msra.mxu0 0
    %1947 = vmatprep.subr.bf16.mxu0 0
    %1948 = vmatpush2.bf16.msra.mxu0 0
    %1949 = vmatprep.subr.bf16.mxu0 0
    %1950 = vmatpush2.bf16.msra.mxu0 0
    %1951 = vmatprep.subr.bf16.mxu0 0
    %1952 = vmatpush2.bf16.msra.mxu0 0
    %1953 = vmatprep.subr.bf16.mxu0 0
    %1954 = vmatpush2.bf16.msra.mxu0 0
    %1955 = vmatprep.mubr.bf16.mxu0 0
    %1956 = vmatmul.mubr.bf16.gmra.mxu0 %v1707
    %v1957 = vpop.f32.mrf.mxu0
    %v1958 = vadd.f32 %v1746, %v1957
    %v1959 = vpop.f32.mrf.mxu0
    %v1960 = vadd.f32 %v1750, %v1959
    %v1961 = vpop.f32.mrf.mxu0
    %v1962 = vadd.f32 %v1746, %v1961
    %v1963 = vpop.f32.mrf.mxu0
    %v1964 = vadd.f32 %v1750, %v1963
    %1965 = vmatprep.mubr.bf16.mxu0 0
    %1966 = vmatmul.mubr.bf16.gmra.mxu0 %v1708
    %v1967 = vpop.f32.mrf.mxu0
    %v1968 = vadd.f32 %v1746, %v1967
    %v1969 = vpop.f32.mrf.mxu0
    %v1970 = vadd.f32 %v1750, %v1969
    %v1971 = vpop.f32.mrf.mxu0
    %v1972 = vadd.f32 %v1746, %v1971
    %v1973 = vpop.f32.mrf.mxu0
    %v1974 = vadd.f32 %v1750, %v1973
    %1975 = vdwg.mxu0
    %1976 = vmatprep.subr.bf16.mxu0 %v1890
    %1977 = vmatpush1.bf16.msra.mxu0 %v1889
    %1978 = vmatprep.subr.bf16.mxu0 %v1886
    %1979 = vmatpush1.bf16.msra.mxu0 %v1885
    %1980 = vmatprep.subr.bf16.mxu0 %v1882
    %1981 = vmatpush1.bf16.msra.mxu0 %v1881
    %1982 = vmatprep.subr.bf16.mxu0 %v1878
    %1983 = vmatpush1.bf16.msra.mxu0 %v1877
    %1984 = vmatprep.subr.bf16.mxu0 %v1874
    %1985 = vmatpush1.bf16.msra.mxu0 %v1873
    %1986 = vmatprep.subr.bf16.mxu0 %v1870
    %1987 = vmatpush1.bf16.msra.mxu0 %v1869
    %1988 = vmatprep.subr.bf16.mxu0 %v1866
    %1989 = vmatpush1.bf16.msra.mxu0 %v1865
    %1990 = vmatprep.subr.bf16.mxu0 %v1862
    %1991 = vmatpush1.bf16.msra.mxu0 %v1861
    %1992 = vmatprep.subr.bf16.mxu0 0
    %1993 = vmatpush2.bf16.msra.mxu0 0
    %1994 = vmatprep.subr.bf16.mxu0 0
    %1995 = vmatpush2.bf16.msra.mxu0 0
    %1996 = vmatprep.subr.bf16.mxu0 0
    %1997 = vmatpush2.bf16.msra.mxu0 0
    %1998 = vmatprep.subr.bf16.mxu0 0
    %1999 = vmatpush2.bf16.msra.mxu0 0
    %2000 = vmatprep.subr.bf16.mxu0 0
    %2001 = vmatpush2.bf16.msra.mxu0 0
    %2002 = vmatprep.subr.bf16.mxu0 0
    %2003 = vmatpush2.bf16.msra.mxu0 0
    %2004 = vmatprep.subr.bf16.mxu0 0
    %2005 = vmatpush2.bf16.msra.mxu0 0
    %2006 = vmatprep.subr.bf16.mxu0 0
    %2007 = vmatpush2.bf16.msra.mxu0 0
    %2008 = vmatprep.mubr.bf16.mxu0 0
    %2009 = vmatmul.mubr.bf16.gmra.mxu0 %v1707
    %v2010 = vpop.f32.mrf.mxu0
    %v2011 = vadd.f32 %v1754, %v2010
    %v2012 = vpop.f32.mrf.mxu0
    %v2013 = vadd.f32 %v1758, %v2012
    %v2014 = vpop.f32.mrf.mxu0
    %v2015 = vadd.f32 %v1754, %v2014
    %v2016 = vpop.f32.mrf.mxu0
    %v2017 = vadd.f32 %v1758, %v2016
    %2018 = vmatprep.mubr.bf16.mxu0 0
    %2019 = vmatmul.mubr.bf16.gmra.mxu0 %v1708
    %v2020 = vpop.f32.mrf.mxu0
    %v2021 = vadd.f32 %v1754, %v2020
    %v2022 = vpop.f32.mrf.mxu0
    %v2023 = vadd.f32 %v1758, %v2022
    %v2024 = vpop.f32.mrf.mxu0
    %v2025 = vadd.f32 %v1754, %v2024
    %v2026 = vpop.f32.mrf.mxu0
    %v2027 = vadd.f32 %v1758, %v2026
    %2028 = vdwg.mxu0
    %v2029 = vmax.f32 %v1958, 0.0
    %v2030 = vmax.f32 %v1960, 0.0
    %v2031 = vmax.f32 %v2011, 0.0
    %v2032 = vmax.f32 %v2013, 0.0
    %v2033 = vmax.f32 %v1962, 0.0
    %v2034 = vmax.f32 %v1964, 0.0
    %v2035 = vmax.f32 %v2015, 0.0
    %v2036 = vmax.f32 %v2017, 0.0
    %v2037 = vmax.f32 %v1968, 0.0
    %v2038 = vmax.f32 %v1970, 0.0
    %v2039 = vmax.f32 %v2021, 0.0
    %v2040 = vmax.f32 %v2023, 0.0
    %v2041 = vmax.f32 %v1972, 0.0
    %v2042 = vmax.f32 %v1974, 0.0
    %v2043 = vmax.f32 %v2025, 0.0
    %v2044 = vmax.f32 %v2027, 0.0
    %v2045 = vpack.c.bf16 %v2033, %v2029
    %v2046 = vpack.c.bf16 %v2034, %v2030
    %v2047 = vpack.c.bf16 %v2035, %v2031
    %v2048 = vpack.c.bf16 %v2036, %v2032
    %v2049 = vpack.c.bf16 %v2041, %v2037
    %v2050 = vpack.c.bf16 %v2042, %v2038
    %v2051 = vpack.c.bf16 %v2043, %v2039
    %v2052 = vpack.c.bf16 %v2044, %v2040
    %v2053 = vld [vmem:[#allocation10] sm:$0xf]
    %v2054 = vld [vmem:[#allocation10 + $0x4] sm:$0xf]
    %v2055 = vld [vmem:[#allocation10 + $0x8] sm:$0xf]
    %v2056 = vld [vmem:[#allocation10 + $0xc] sm:$0xf]
    %v2057 = vld [vmem:[#allocation10 + $0x10] sm:$0xf]
    %v2058 = vld [vmem:[#allocation10 + $0x14] sm:$0xf]
    %v2059 = vld [vmem:[#allocation10 + $0x18] sm:$0xf]
    %v2060 = vld [vmem:[#allocation10 + $0x1c] sm:$0xf]
    %v2061 = vld [vmem:[#allocation10 + $0x20] sm:$0xf]
    %v2062 = vld [vmem:[#allocation10 + $0x24] sm:$0xf]
    %v2063 = vld [vmem:[#allocation10 + $0x28] sm:$0xf]
    %v2064 = vld [vmem:[#allocation10 + $0x2c] sm:$0xf]
    %v2065 = vld [vmem:[#allocation10 + $0x30] sm:$0xf]
    %v2066 = vld [vmem:[#allocation10 + $0x34] sm:$0xf]
    %v2067 = vld [vmem:[#allocation10 + $0x38] sm:$0xf]
    %v2068 = vld [vmem:[#allocation10 + $0x3c] sm:$0xf]
    %v2069 = vld [vmem:[#allocation10 + $0x40] sm:$0xf]
    %v2070 = vld [vmem:[#allocation10 + $0x44] sm:$0xf]
    %v2071 = vld [vmem:[#allocation10 + $0x48] sm:$0xf]
    %v2072 = vld [vmem:[#allocation10 + $0x4c] sm:$0xf]
    %v2073 = vld [vmem:[#allocation10 + $0x50] sm:$0xf]
    %v2074 = vld [vmem:[#allocation10 + $0x54] sm:$0xf]
    %v2075 = vld [vmem:[#allocation10 + $0x58] sm:$0xf]
    %v2076 = vld [vmem:[#allocation10 + $0x5c] sm:$0xf]
    %v2077 = vld [vmem:[#allocation10 + $0x60] sm:$0xf]
    %v2078 = vld [vmem:[#allocation10 + $0x64] sm:$0xf]
    %v2079 = vld [vmem:[#allocation10 + $0x68] sm:$0xf]
    %v2080 = vld [vmem:[#allocation10 + $0x6c] sm:$0xf]
    %v2081 = vld [vmem:[#allocation10 + $0x70] sm:$0xf]
    %v2082 = vld [vmem:[#allocation10 + $0x74] sm:$0xf]
    %v2083 = vld [vmem:[#allocation10 + $0x78] sm:$0xf]
    %v2084 = vld [vmem:[#allocation10 + $0x7c] sm:$0xf]
    %v2085 = vld [vmem:[#allocation10 + $0x80] sm:$0xf]
    %v2086 = vld [vmem:[#allocation10 + $0x84] sm:$0xf]
    %v2087 = vld [vmem:[#allocation10 + $0x88] sm:$0xf]
    %v2088 = vld [vmem:[#allocation10 + $0x8c] sm:$0xf]
    %v2089 = vld [vmem:[#allocation10 + $0x90] sm:$0xf]
    %v2090 = vld [vmem:[#allocation10 + $0x94] sm:$0xf]
    %v2091 = vld [vmem:[#allocation10 + $0x98] sm:$0xf]
    %v2092 = vld [vmem:[#allocation10 + $0x9c] sm:$0xf]
    %v2093 = vld [vmem:[#allocation10 + $0xa0] sm:$0xf]
    %v2094 = vld [vmem:[#allocation10 + $0xa4] sm:$0xf]
    %v2095 = vld [vmem:[#allocation10 + $0xa8] sm:$0xf]
    %v2096 = vld [vmem:[#allocation10 + $0xac] sm:$0xf]
    %v2097 = vld [vmem:[#allocation10 + $0xb0] sm:$0xf]
    %v2098 = vld [vmem:[#allocation10 + $0xb4] sm:$0xf]
    %v2099 = vld [vmem:[#allocation10 + $0xb8] sm:$0xf]
    %v2100 = vld [vmem:[#allocation10 + $0xbc] sm:$0xf]
    %v2101 = vld [vmem:[#allocation10 + $0xc0] sm:$0xf]
    %v2102 = vld [vmem:[#allocation10 + $0xc4] sm:$0xf]
    %v2103 = vld [vmem:[#allocation10 + $0xc8] sm:$0xf]
    %v2104 = vld [vmem:[#allocation10 + $0xcc] sm:$0xf]
    %v2105 = vld [vmem:[#allocation10 + $0xd0] sm:$0xf]
    %v2106 = vld [vmem:[#allocation10 + $0xd4] sm:$0xf]
    %v2107 = vld [vmem:[#allocation10 + $0xd8] sm:$0xf]
    %v2108 = vld [vmem:[#allocation10 + $0xdc] sm:$0xf]
    %v2109 = vld [vmem:[#allocation10 + $0xe0] sm:$0xf]
    %v2110 = vld [vmem:[#allocation10 + $0xe4] sm:$0xf]
    %v2111 = vld [vmem:[#allocation10 + $0xe8] sm:$0xf]
    %v2112 = vld [vmem:[#allocation10 + $0xec] sm:$0xf]
    %v2113 = vld [vmem:[#allocation10 + $0xf0] sm:$0xf]
    %v2114 = vld [vmem:[#allocation10 + $0xf4] sm:$0xf]
    %v2115 = vld [vmem:[#allocation10 + $0xf8] sm:$0xf]
    %v2116 = vld [vmem:[#allocation10 + $0xfc] sm:$0xf]
    %v2117 = vld [vmem:[%s11] sm:$0x1]
    %v2119 = vlaneseq
    %v2120 = vshrl.u32 %v2119, 7
    %v2121 = vsub.s32 0, %v2120
    %v2122 = vrot.slane %v2117, %v2121
    %v2188 = vunpack.c.l.b16 %v2053
    %v2189 = vunpack.c.l.b16 %v2054
    %v2190 = vunpack.c.l.b16 %v2055
    %v2191 = vunpack.c.l.b16 %v2056
    %v2192 = vunpack.c.l.b16 %v2057
    %v2193 = vunpack.c.l.b16 %v2058
    %v2194 = vunpack.c.l.b16 %v2059
    %v2195 = vunpack.c.l.b16 %v2060
    %v2196 = vunpack.c.l.b16 %v2061
    %v2197 = vunpack.c.l.b16 %v2062
    %v2198 = vunpack.c.l.b16 %v2063
    %v2199 = vunpack.c.l.b16 %v2064
    %v2200 = vunpack.c.l.b16 %v2065
    %v2201 = vunpack.c.l.b16 %v2066
    %v2202 = vunpack.c.l.b16 %v2067
    %v2203 = vunpack.c.l.b16 %v2068
    %v2204 = vunpack.c.l.b16 %v2069
    %v2205 = vunpack.c.l.b16 %v2070
    %v2206 = vunpack.c.l.b16 %v2071
    %v2207 = vunpack.c.l.b16 %v2072
    %v2208 = vunpack.c.l.b16 %v2073
    %v2209 = vunpack.c.l.b16 %v2074
    %v2210 = vunpack.c.l.b16 %v2075
    %v2211 = vunpack.c.l.b16 %v2076
    %v2212 = vunpack.c.l.b16 %v2077
    %v2213 = vunpack.c.l.b16 %v2078
    %v2214 = vunpack.c.l.b16 %v2079
    %v2215 = vunpack.c.l.b16 %v2080
    %v2216 = vunpack.c.l.b16 %v2081
    %v2217 = vunpack.c.l.b16 %v2082
    %v2218 = vunpack.c.l.b16 %v2083
    %v2219 = vunpack.c.l.b16 %v2084
    %v2220 = vunpack.c.l.b16 %v2085
    %v2221 = vunpack.c.l.b16 %v2086
    %v2222 = vunpack.c.l.b16 %v2087
    %v2223 = vunpack.c.l.b16 %v2088
    %v2224 = vunpack.c.l.b16 %v2089
    %v2225 = vunpack.c.l.b16 %v2090
    %v2226 = vunpack.c.l.b16 %v2091
    %v2227 = vunpack.c.l.b16 %v2092
    %v2228 = vunpack.c.l.b16 %v2093
    %v2229 = vunpack.c.l.b16 %v2094
    %v2230 = vunpack.c.l.b16 %v2095
    %v2231 = vunpack.c.l.b16 %v2096
    %v2232 = vunpack.c.l.b16 %v2097
    %v2233 = vunpack.c.l.b16 %v2098
    %v2234 = vunpack.c.l.b16 %v2099
    %v2235 = vunpack.c.l.b16 %v2100
    %v2236 = vunpack.c.l.b16 %v2101
    %v2237 = vunpack.c.l.b16 %v2102
    %v2238 = vunpack.c.l.b16 %v2103
    %v2239 = vunpack.c.l.b16 %v2104
    %v2240 = vunpack.c.l.b16 %v2105
    %v2241 = vunpack.c.l.b16 %v2106
    %v2242 = vunpack.c.l.b16 %v2107
    %v2243 = vunpack.c.l.b16 %v2108
    %v2244 = vunpack.c.l.b16 %v2109
    %v2245 = vunpack.c.l.b16 %v2110
    %v2246 = vunpack.c.l.b16 %v2111
    %v2247 = vunpack.c.l.b16 %v2112
    %v2248 = vunpack.c.l.b16 %v2113
    %v2249 = vunpack.c.l.b16 %v2114
    %v2250 = vunpack.c.l.b16 %v2115
    %v2251 = vunpack.c.l.b16 %v2116
    %v2252 = vpack.c.b16 %v2189, %v2188
    %v2253 = vpack.c.b16 %v2191, %v2190
    %v2254 = vpack.c.b16 %v2193, %v2192
    %v2255 = vpack.c.b16 %v2195, %v2194
    %v2256 = vpack.c.b16 %v2197, %v2196
    %v2257 = vpack.c.b16 %v2199, %v2198
    %v2258 = vpack.c.b16 %v2201, %v2200
    %v2259 = vpack.c.b16 %v2203, %v2202
    %v2260 = vpack.c.b16 %v2205, %v2204
    %v2261 = vpack.c.b16 %v2207, %v2206
    %v2262 = vpack.c.b16 %v2209, %v2208
    %v2263 = vpack.c.b16 %v2211, %v2210
    %v2264 = vpack.c.b16 %v2213, %v2212
    %v2265 = vpack.c.b16 %v2215, %v2214
    %v2266 = vpack.c.b16 %v2217, %v2216
    %v2267 = vpack.c.b16 %v2219, %v2218
    %v2268 = vpack.c.b16 %v2221, %v2220
    %v2269 = vpack.c.b16 %v2223, %v2222
    %v2270 = vpack.c.b16 %v2225, %v2224
    %v2271 = vpack.c.b16 %v2227, %v2226
    %v2272 = vpack.c.b16 %v2229, %v2228
    %v2273 = vpack.c.b16 %v2231, %v2230
    %v2274 = vpack.c.b16 %v2233, %v2232
    %v2275 = vpack.c.b16 %v2235, %v2234
    %v2276 = vpack.c.b16 %v2237, %v2236
    %v2277 = vpack.c.b16 %v2239, %v2238
    %v2278 = vpack.c.b16 %v2241, %v2240
    %v2279 = vpack.c.b16 %v2243, %v2242
    %v2280 = vpack.c.b16 %v2245, %v2244
    %v2281 = vpack.c.b16 %v2247, %v2246
    %v2282 = vpack.c.b16 %v2249, %v2248
    %v2283 = vpack.c.b16 %v2251, %v2250
    %2316 = vmatprep.subr.bf16.mxu0 0
    %2317 = vmatpush1.bf16.msra.mxu0 %v2259
    %2318 = vmatprep.subr.bf16.mxu0 0
    %2319 = vmatpush1.bf16.msra.mxu0 %v2258
    %2320 = vmatprep.subr.bf16.mxu0 0
    %2321 = vmatpush1.bf16.msra.mxu0 %v2257
    %2322 = vmatprep.subr.bf16.mxu0 0
    %2323 = vmatpush1.bf16.msra.mxu0 %v2256
    %2324 = vmatprep.subr.bf16.mxu0 0
    %2325 = vmatpush1.bf16.msra.mxu0 %v2255
    %2326 = vmatprep.subr.bf16.mxu0 0
    %2327 = vmatpush1.bf16.msra.mxu0 %v2254
    %2328 = vmatprep.subr.bf16.mxu0 0
    %2329 = vmatpush1.bf16.msra.mxu0 %v2253
    %2330 = vmatprep.subr.bf16.mxu0 0
    %2331 = vmatpush1.bf16.msra.mxu0 %v2252
    %2332 = vmatprep.subr.bf16.mxu0 0
    %2333 = vmatpush2.bf16.msra.mxu0 %v2267
    %2334 = vmatprep.subr.bf16.mxu0 0
    %2335 = vmatpush2.bf16.msra.mxu0 %v2266
    %2336 = vmatprep.subr.bf16.mxu0 0
    %2337 = vmatpush2.bf16.msra.mxu0 %v2265
    %2338 = vmatprep.subr.bf16.mxu0 0
    %2339 = vmatpush2.bf16.msra.mxu0 %v2264
    %2340 = vmatprep.subr.bf16.mxu0 0
    %2341 = vmatpush2.bf16.msra.mxu0 %v2263
    %2342 = vmatprep.subr.bf16.mxu0 0
    %2343 = vmatpush2.bf16.msra.mxu0 %v2262
    %2344 = vmatprep.subr.bf16.mxu0 0
    %2345 = vmatpush2.bf16.msra.mxu0 %v2261
    %2346 = vmatprep.subr.bf16.mxu0 0
    %2347 = vmatpush2.bf16.msra.mxu0 %v2260
    %2348 = vmatprep.mubr.bf16.mxu0 %v2046
    %2349 = vmatmul.mubr.bf16.gmra.mxu0 %v2045
    %v2350 = vpop.f32.mrf.mxu0
    %v2351 = vadd.f32 %v2122, %v2350
    %v2352 = vpop.f32.mrf.mxu0
    %v2353 = vpop.f32.mrf.mxu0
    %v2354 = vadd.f32 %v2122, %v2353
    %v2355 = vpop.f32.mrf.mxu0
    %2356 = vmatprep.mubr.bf16.mxu0 %v2050
    %2357 = vmatmul.mubr.bf16.gmra.mxu0 %v2049
    %v2358 = vpop.f32.mrf.mxu0
    %v2359 = vadd.f32 %v2122, %v2358
    %v2360 = vpop.f32.mrf.mxu0
    %v2361 = vpop.f32.mrf.mxu0
    %v2362 = vadd.f32 %v2122, %v2361
    %v2363 = vpop.f32.mrf.mxu0
    %2364 = vdwg.mxu0
    %2365 = vmatprep.subr.bf16.mxu0 0
    %2366 = vmatpush1.bf16.msra.mxu0 %v2275
    %2367 = vmatprep.subr.bf16.mxu0 0
    %2368 = vmatpush1.bf16.msra.mxu0 %v2274
    %2369 = vmatprep.subr.bf16.mxu0 0
    %2370 = vmatpush1.bf16.msra.mxu0 %v2273
    %2371 = vmatprep.subr.bf16.mxu0 0
    %2372 = vmatpush1.bf16.msra.mxu0 %v2272
    %2373 = vmatprep.subr.bf16.mxu0 0
    %2374 = vmatpush1.bf16.msra.mxu0 %v2271
    %2375 = vmatprep.subr.bf16.mxu0 0
    %2376 = vmatpush1.bf16.msra.mxu0 %v2270
    %2377 = vmatprep.subr.bf16.mxu0 0
    %2378 = vmatpush1.bf16.msra.mxu0 %v2269
    %2379 = vmatprep.subr.bf16.mxu0 0
    %2380 = vmatpush1.bf16.msra.mxu0 %v2268
    %2381 = vmatprep.subr.bf16.mxu0 0
    %2382 = vmatpush2.bf16.msra.mxu0 %v2283
    %2383 = vmatprep.subr.bf16.mxu0 0
    %2384 = vmatpush2.bf16.msra.mxu0 %v2282
    %2385 = vmatprep.subr.bf16.mxu0 0
    %2386 = vmatpush2.bf16.msra.mxu0 %v2281
    %2387 = vmatprep.subr.bf16.mxu0 0
    %2388 = vmatpush2.bf16.msra.mxu0 %v2280
    %2389 = vmatprep.subr.bf16.mxu0 0
    %2390 = vmatpush2.bf16.msra.mxu0 %v2279
    %2391 = vmatprep.subr.bf16.mxu0 0
    %2392 = vmatpush2.bf16.msra.mxu0 %v2278
    %2393 = vmatprep.subr.bf16.mxu0 0
    %2394 = vmatpush2.bf16.msra.mxu0 %v2277
    %2395 = vmatprep.subr.bf16.mxu0 0
    %2396 = vmatpush2.bf16.msra.mxu0 %v2276
    %2397 = vmatprep.mubr.bf16.mxu0 %v2048
    %2398 = vmatmul.mubr.bf16.gmra.mxu0 %v2047
    %v2399 = vpop.f32.mrf.mxu0
    %v2400 = vadd.f32 %v2351, %v2399
    %v2401 = vpop.f32.mrf.mxu0
    %v2402 = vpop.f32.mrf.mxu0
    %v2403 = vadd.f32 %v2354, %v2402
    %v2404 = vpop.f32.mrf.mxu0
    %2405 = vmatprep.mubr.bf16.mxu0 %v2052
    %2406 = vmatmul.mubr.bf16.gmra.mxu0 %v2051
    %v2407 = vpop.f32.mrf.mxu0
    %v2408 = vadd.f32 %v2359, %v2407
    %v2409 = vpop.f32.mrf.mxu0
    %v2410 = vpop.f32.mrf.mxu0
    %v2411 = vadd.f32 %v2362, %v2410
    %v2412 = vpop.f32.mrf.mxu0
    %2413 = vdwg.mxu0
    %v2414 = vadd.f32 %v1637, %v2400
    %v2415 = vadd.f32 %v1638, %v2403
    %v2416 = vadd.f32 %v1639, %v2408
    %v2417 = vadd.f32 %v1640, %v2411
    %2418 = vst [vmem:[#allocation11] sm:$0xff] %v2414
    %2419 = vst [vmem:[#allocation11 + $0x8] sm:$0xff] %v2415
    %2420 = vst [vmem:[#allocation11 + $0x10] sm:$0xff] %v2416
    %2421 = vst [vmem:[#allocation11 + $0x18] sm:$0xff] %v2417
    // Predicated region
    $region70: #{tpu_custom_call.1} parent=1 // pred_check
      _
    $region71: #{tpu_custom_call.1} parent=1 // pred_check_branch
      %2423 = sbr.rel (0) target = $region73
    $region72: #{tpu_custom_call.1} parent=1 // pred_region
      %s2425 = ssub.s32 512, 512
      %2426 = vsyncadd [#allocation4], %s2425
      %s2427 = sshll.u32 [#allocation11], 4
      %s2428 = int_to_ptr.vmem [resolvable:$true] %s2427
      %2433 = dma.vmem_to_hbm [thread:$0]  %s2428, 512, %s12, [#allocation4], 128, 128, 8
    $region73: #{tpu_custom_call.1} parent=1 // pred_fallthru
      _
    // Predicated region
    $region74: #{tpu_custom_call.1} parent=1 // pred_check
      _
    $region75: #{tpu_custom_call.1} parent=1 // pred_check_branch
      %2435 = sbr.rel (0) target = $region77
    $region76: #{tpu_custom_call.1} parent=1 // pred_region
      %2436 = dma.done [#allocation4], 512
    $region77: #{tpu_custom_call.1} parent=1 // pred_fallthru
      _
    %2437 = vsyncpa [#allocation3], 1
    %2438 = vsyncpa [#allocation6], 1
    %2439 = vsyncpa [#allocation9], 1
    %2440 = vsyncpa [#allocation4], 1

</llo_original>
